<compile_context>
chip_gen: v7x
topology: tpu7x:2x2x1
jax: 0.10.0
libtpu: 0.0.40
codegen_flags: <defaults>
</compile_context>

<pallas_src>
import functools

import jax
import jax.numpy as jnp
from jax.experimental import pallas as pl
from jax.experimental.pallas import tpu as pltpu

LANE = 128
SUBLANE = 8


# --------------------------------------------------------------------------
# Hardware queries (defensive: fall back to device_kind heuristics).
# --------------------------------------------------------------------------
def _device_kind():
    try:
        return jax.devices()[0].device_kind.lower()
    except Exception:
        return ""


def _is_v7x():
    kind = _device_kind()
    return ("v7" in kind) or ("7x" in kind)


def _vmem_capacity_bytes():
    try:
        return int(pltpu.get_tpu_info().vmem_capacity_bytes)
    except Exception:
        return (64 << 20) if _is_v7x() else (128 << 20)


def _default_weight_dtype():
    # v5e/v6e: int8 weights (per-channel scales) to halve weight DMA bytes.
    # v7x: no integer MXU modes -> keep bf16.
    # TODO(synk): use fp8 (e4m3) weights + per-channel scales on v7x.
    return jnp.bfloat16 if _is_v7x() else jnp.int8


def _resident_param_byte_limit():
    # Keep single-buffered resident params to ~1/4 of physical VMEM so the IO
    # tiles / intermediates still fit: 32 MiB on v5e/v6e, 16 MiB on v7x.
    return _vmem_capacity_bytes() // 4


def _vmem_limit_bytes(required_bytes):
    cap = _vmem_capacity_bytes()
    want = int(required_bytes) + (8 << 20)            # + headroom
    return int(max(16 << 20, min(want, cap - (4 << 20))))


# --------------------------------------------------------------------------
# Parameters (PyTorch nn.Linear: weight stored transposed as (in, out)).
# --------------------------------------------------------------------------
def init_reward_predictor_params(key, input_dim, hidden_dims,
                                 n_hidden_layers=5, dtype=jnp.float32):
    dims = [input_dim] + list(hidden_dims[: n_hidden_layers + 1]) + [1]
    params = []
    for i in range(len(dims) - 1):
        fan_in, fan_out = dims[i], dims[i + 1]
        key, kw, kb = jax.random.split(key, 3)
        bound = 1.0 / float(fan_in) ** 0.5
        w = jax.random.uniform(kw, (fan_in, fan_out), dtype, -bound, bound)
        b = jax.random.uniform(kb, (1, fan_out), dtype, -bound, bound)
        params.append((w, b))
    return params


def prepare_params(params, weight_dtype=None):
    """Quantize/cast weights and pack per-layer (scale, bias).

    Returns (weights, scale_biases, n_out_real):
      weights[i]      : (K_i, N_i) weight_dtype (int8 on v5e/v6e, bf16 on v7x);
                        last layer's N padded to a multiple of 128 (lane-dense store).
      scale_biases[i] : (2, N_i) f32 -- row0 = per-column dequant scale, row1 = bias.
                        Layer math: y = (x @ w) * scale + bias.
    """
    if weight_dtype is None:
        weight_dtype = _default_weight_dtype()
    is_int8 = jnp.dtype(weight_dtype) == jnp.dtype(jnp.int8)

    weights, scale_biases = [], []
    n_layers = len(params)
    n_out_real = params[-1][0].shape[1]
    for i, (w, b) in enumerate(params):
        w = w.astype(jnp.float32)
        b = b.astype(jnp.float32)
        if i == n_layers - 1 and w.shape[1] % LANE != 0:
            pad = LANE - (w.shape[1] % LANE)
            w = jnp.pad(w, ((0, 0), (0, pad)))
            b = jnp.pad(b, ((0, 0), (0, pad)))
        if is_int8:
            amax = jnp.max(jnp.abs(w), axis=0)
            scale = jnp.where(amax > 0, amax / 127.0, 1.0)
            w_q = jnp.clip(jnp.round(w / scale), -127, 127).astype(jnp.int8)
        else:
            scale = jnp.ones((w.shape[1],), jnp.float32)
            w_q = w.astype(weight_dtype)
        weights.append(w_q)
        scale_biases.append(jnp.concatenate([scale[None, :], b], axis=0))
    return weights, scale_biases, n_out_real


# --------------------------------------------------------------------------
# Fused (VMEM-resident weights) path: whole MLP in one pallas_call.
# --------------------------------------------------------------------------
def _fused_mlp_kernel(x_ref, *refs, n_layers, compute_dtype):
    out_ref = refs[-1]
    h = x_ref[...]                                       # (tm, K_in), compute_dtype
    for i in range(n_layers):
        w = refs[2 * i][...].astype(compute_dtype)       # dequant cast (VPU), int8->bf16
        sb = refs[2 * i + 1][...]                        # (2, N_i) f32
        y = jnp.dot(h, w, preferred_element_type=jnp.float32)
        y = y * sb[0:1, :] + sb[1:2, :]                  # per-column scale + bias (f32)
        if i < n_layers - 1:
            y = jnp.maximum(y, 0.0)
        h = y.astype(compute_dtype)
    out_ref[...] = h.astype(out_ref.dtype)


def fused_mlp(x, weights, scale_biases, *, compute_dtype=jnp.bfloat16,
              out_dtype=jnp.bfloat16, tm_max=256, weight_buffer_count=1):
    M, K_in = x.shape
    n_layers = len(weights)
    N_out = weights[-1].shape[1]

    x = x.astype(compute_dtype)                          # halve x DMA bytes

    resident_bytes = (sum(w.size * w.dtype.itemsize for w in weights)
                      + sum(sb.size * sb.dtype.itemsize for sb in scale_biases))

    # Batch padding / tiling (batch is the only grid axis).
    M_pad = max(SUBLANE, pl.cdiv(M, SUBLANE) * SUBLANE)
    tm = M_pad if M_pad <= tm_max else tm_max
    if M_pad % tm:
        M_pad = pl.cdiv(M_pad, tm) * tm
    if M_pad != M:
        x = jnp.pad(x, ((0, M_pad - M), (0, 0)))
    grid = (M_pad // tm,)

    weight_mode = (pl.Buffered(weight_buffer_count)
                   if weight_buffer_count is not None else None)

    in_specs = [pl.BlockSpec((tm, K_in), lambda i: (i, 0))]
    args = [x]
    for w, sb in zip(weights, scale_biases):
        kw, nw = w.shape
        if weight_mode is None:
            in_specs.append(pl.BlockSpec((kw, nw), lambda i: (0, 0)))
            in_specs.append(pl.BlockSpec((2, nw), lambda i: (0, 0)))
        else:
            in_specs.append(pl.BlockSpec((kw, nw), lambda i: (0, 0),
                                         pipeline_mode=weight_mode))
            in_specs.append(pl.BlockSpec((2, nw), lambda i: (0, 0),
                                         pipeline_mode=weight_mode))
        args.append(w)
        args.append(sb)

    # Explicit VMEM budget: resident params x buffer count + IO tiles + headroom.
    buf = weight_buffer_count if weight_buffer_count is not None else 2
    max_n = max(w.shape[1] for w in weights)
    vmem_needed = (resident_bytes * buf
                   + 2 * tm * K_in * jnp.dtype(compute_dtype).itemsize
                   + 2 * tm * N_out * jnp.dtype(out_dtype).itemsize
                   + 4 * tm * max(K_in, max_n) * 4)

    flops = 2 * M_pad * sum(w.shape[0] * w.shape[1] for w in weights)
    bytes_accessed = (x.size * x.dtype.itemsize + resident_bytes
                      + M_pad * N_out * jnp.dtype(out_dtype).itemsize)

    # Only shard the batch axis across TensorCores when each core gets enough
    # grid steps to amortize its own copy of the resident weights.
    semantics = ("parallel",) if grid[0] >= 8 else ("arbitrary",)

    kernel = functools.partial(_fused_mlp_kernel, n_layers=n_layers,
                               compute_dtype=compute_dtype)
    out = pl.pallas_call(
        kernel,
        out_shape=jax.ShapeDtypeStruct((M_pad, N_out), out_dtype),
        grid_spec=pltpu.PrefetchScalarGridSpec(
            num_scalar_prefetch=0, grid=grid,
            in_specs=in_specs,
            out_specs=pl.BlockSpec((tm, N_out), lambda i: (i, 0))),
        compiler_params=pltpu.CompilerParams(
            dimension_semantics=semantics,
            vmem_limit_bytes=_vmem_limit_bytes(vmem_needed)),
        cost_estimate=pl.CostEstimate(flops=flops, transcendentals=0,
                                      bytes_accessed=bytes_accessed),
    )(*args)
    return out[:M]


# --------------------------------------------------------------------------
# Streamed-weight path: one pallas_call per layer, weights tiled over (K, N).
# Used when the parameters do not fit VMEM-resident (real 16384-wide model).
# --------------------------------------------------------------------------
def _streamed_layer_kernel(x_ref, w_ref, sb_ref, o_ref, acc_ref, *,
                           apply_relu, compute_dtype):
    k = pl.program_id(1)

    @pl.when(k == 0)
    def _():
        acc_ref[...] = jnp.zeros_like(acc_ref)

    acc_ref[...] += jnp.dot(x_ref[...], w_ref[...].astype(compute_dtype),
                            preferred_element_type=jnp.float32)

    @pl.when(k == pl.num_programs(1) - 1)
    def _():
        y = acc_ref[...] * sb_ref[0:1, :] + sb_ref[1:2, :]
        if apply_relu:
            y = jnp.maximum(y, 0.0)
        o_ref[...] = y.astype(o_ref.dtype)


def streamed_linear(x, w, sb, *, apply_relu, compute_dtype=jnp.bfloat16,
                    out_dtype=jnp.bfloat16, tk=None, tn=None,
                    weight_buffer_count=3):
    M, K = x.shape
    _, N = w.shape

    x = x.astype(compute_dtype)
    M_pad = max(SUBLANE, pl.cdiv(M, SUBLANE) * SUBLANE)
    if M_pad != M:
        x = jnp.pad(x, ((0, M_pad - M), (0, 0)))

    # v7x (64 MiB VMEM): smaller weight tiles + deeper buffering keep the faster
    # HBM saturated; v5e/v6e (128 MiB) can afford bigger tiles.
    small_vmem = _vmem_capacity_bytes() <= (64 << 20)
    tk_d, tn_d = (512, 256) if small_vmem else (1024, 512)
    tk = min(K, tk if tk is not None else tk_d)
    tn = min(N, tn if tn is not None else tn_d)
    assert K % tk == 0 and N % tn == 0, "weight dims must divide the tiles"

    grid = (N // tn, K // tk)                       # reduction axis (K) last

    wmode = pl.Buffered(weight_buffer_count) if weight_buffer_count else None
    if wmode is None:
        w_spec = pl.BlockSpec((tk, tn), lambda n, k: (k, n))
    else:
        w_spec = pl.BlockSpec((tk, tn), lambda n, k: (k, n), pipeline_mode=wmode)

    buf = weight_buffer_count or 2
    vmem_needed = (buf * tk * tn * w.dtype.itemsize
                   + 2 * M_pad * tk * jnp.dtype(compute_dtype).itemsize
                   + 2 * M_pad * tn * jnp.dtype(out_dtype).itemsize
                   + M_pad * tn * 4
                   + 4 * tn * 4)

    flops = 2 * M_pad * K * N
    bytes_accessed = (M_pad * K * jnp.dtype(compute_dtype).itemsize * (N // tn)
                      + K * N * w.dtype.itemsize
                      + M_pad * N * jnp.dtype(out_dtype).itemsize)

    kernel = functools.partial(_streamed_layer_kernel, apply_relu=apply_relu,
                               compute_dtype=compute_dtype)
    out = pl.pallas_call(
        kernel,
        out_shape=jax.ShapeDtypeStruct((M_pad, N), out_dtype),
        grid_spec=pltpu.PrefetchScalarGridSpec(
            num_scalar_prefetch=0, grid=grid,
            in_specs=[pl.BlockSpec((M_pad, tk), lambda n, k: (0, k)),
                      w_spec,
                      pl.BlockSpec((2, tn), lambda n, k: (0, n))],
            out_specs=pl.BlockSpec((M_pad, tn), lambda n, k: (0, n)),
            scratch_shapes=[pltpu.VMEM((M_pad, tn), jnp.float32)]),
        compiler_params=pltpu.CompilerParams(
            dimension_semantics=("parallel", "arbitrary"),
            vmem_limit_bytes=_vmem_limit_bytes(vmem_needed)),
        cost_estimate=pl.CostEstimate(flops=flops, transcendentals=0,
                                      bytes_accessed=bytes_accessed),
    )(x, w, sb)
    return out[:M]


# --------------------------------------------------------------------------
# Forward + references.
# --------------------------------------------------------------------------
def reward_predictor_forward(prepared, x, *, compute_dtype=jnp.bfloat16,
                             force_streamed=False, streamed_tiles=None):
    """Pallas forward: (Linear+ReLU)*(L-1) then Linear -> (B, 1) f32."""
    weights, scale_biases, n_out = prepared
    resident_bytes = (sum(w.size * w.dtype.itemsize for w in weights)
                      + sum(sb.size * sb.dtype.itemsize for sb in scale_biases))
    use_fused = (not force_streamed) and resident_bytes <= _resident_param_byte_limit()
    tk, tn = streamed_tiles if streamed_tiles is not None else (None, None)

    def run(fused_buf, streamed_buf):
        if use_fused:
            y = fused_mlp(x, weights, scale_biases, compute_dtype=compute_dtype,
                          weight_buffer_count=fused_buf)
        else:
            h = x
            n_layers = len(weights)
            for i, (w, sb) in enumerate(zip(weights, scale_biases)):
                h = streamed_linear(h, w, sb, apply_relu=(i < n_layers - 1),
                                    compute_dtype=compute_dtype, tk=tk, tn=tn,
                                    weight_buffer_count=streamed_buf)
            y = h
        return y[:, :n_out].astype(jnp.float32)

    try:
        # Single-buffer the grid-invariant resident weights; 3-deep stream otherwise.
        return run(1, 3)
    except Exception:
        # pipeline_mode=pl.Buffered not supported on this jax/libtpu combo:
        # fall back to default double-buffering.
        return run(None, None)


def reward_predictor_forward_ref_f32(params, x):
    """True f32 reference matching the PyTorch module exactly."""
    h = x.astype(jnp.float32)
    n_layers = len(params)
    for i, (w, b) in enumerate(params):
        h = h @ w + b
        if i < n_layers - 1:
            h = jnp.maximum(h, 0.0)
    return h


def reward_predictor_forward_ref_quant(prepared, x, compute_dtype=jnp.bfloat16):
    """Plain-JAX mirror of the kernel's exact quantized/bf16 numeric path."""
    weights, scale_biases, n_out = prepared
    h = x.astype(compute_dtype)
    n_layers = len(weights)
    for i, (w, sb) in enumerate(zip(weights, scale_biases)):
        y = jnp.dot(h, w.astype(compute_dtype), preferred_element_type=jnp.float32)
        y = y * sb[0:1, :] + sb[1:2, :]
        if i < n_layers - 1:
            y = jnp.maximum(y, 0.0)
        h = y.astype(compute_dtype)
    return h.astype(jnp.float32)[:, :n_out]


if __name__ == "__main__":
    # Small, TPU-tile-friendly analogue of the 16384..512 default hidden dims.
    batch = 8
    input_dim = 256
    hidden_dims = [256, 256, 128, 128, 128, 128]
    n_hidden_layers = 5

    key = jax.random.PRNGKey(0)
    key, kx = jax.random.split(key)
    x = jax.random.normal(kx, (batch, input_dim), jnp.float32)

    params = init_reward_predictor_params(key, input_dim, hidden_dims,
                                          n_hidden_layers)
    prepared = prepare_params(params)

    # Fully fused (weights VMEM-resident) path.
    out_fused = jax.block_until_ready(reward_predictor_forward(prepared, x))
    # Streamed-weight path (what the full-size model uses), forced here with
    # 128x128 weight tiles so the (N, K) pipeline is actually exercised.
    out_streamed = jax.block_until_ready(
        reward_predictor_forward(prepared, x, force_streamed=True,
                                 streamed_tiles=(128, 128)))

    ref_quant = reward_predictor_forward_ref_quant(prepared, x)
    ref_f32 = reward_predictor_forward_ref_f32(params, x)

    assert out_fused.shape == (batch, 1) and out_fused.dtype == jnp.float32
    assert out_streamed.shape == (batch, 1)

    # Tight check against the exact numeric mirror of the kernel path.
    assert jnp.allclose(out_fused, ref_quant, atol=1e-2, rtol=1e-2), \
        "fused kernel mismatch vs quantized reference"
    assert jnp.allclose(out_streamed, ref_quant, atol=1e-2, rtol=1e-2), \
        "streamed kernel mismatch vs quantized reference"

    # Loose check against the true f32 (PyTorch-equivalent) forward: bounds the
    # int8/bf16 quantization error of the fast path.
    denom = float(jnp.max(jnp.abs(ref_f32))) + 0.1
    rel_err = float(jnp.max(jnp.abs(out_fused - ref_f32))) / denom
    assert rel_err < 0.15, f"quantized forward deviates from f32 reference: {rel_err}"

    print("KERNEL_OK")
</pallas_src>

<mosaic_0001>
module attributes {stable_mosaic.version = 11 : i64} {
  func.func @_fused_mlp_kernel(%arg0: i32, %arg1: memref<8x256xbf16, #tpu.memory_space<vmem>>, %arg2: memref<256x256xi8, #tpu.memory_space<vmem>>, %arg3: memref<2x256xf32, #tpu.memory_space<vmem>>, %arg4: memref<256x256xi8, #tpu.memory_space<vmem>>, %arg5: memref<2x256xf32, #tpu.memory_space<vmem>>, %arg6: memref<256x128xi8, #tpu.memory_space<vmem>>, %arg7: memref<2x128xf32, #tpu.memory_space<vmem>>, %arg8: memref<128x128xi8, #tpu.memory_space<vmem>>, %arg9: memref<2x128xf32, #tpu.memory_space<vmem>>, %arg10: memref<128x128xi8, #tpu.memory_space<vmem>>, %arg11: memref<2x128xf32, #tpu.memory_space<vmem>>, %arg12: memref<128x128xi8, #tpu.memory_space<vmem>>, %arg13: memref<2x128xf32, #tpu.memory_space<vmem>>, %arg14: memref<128x128xi8, #tpu.memory_space<vmem>>, %arg15: memref<2x128xf32, #tpu.memory_space<vmem>>, %arg16: memref<8x128xbf16, #tpu.memory_space<vmem>>) attributes {dimension_semantics = [#tpu.dimension_semantics<arbitrary>], iteration_bounds = array<i64: 1>, scalar_prefetch = 0 : i64, scratch_operands = 0 : i64, tpu.core_type = #tpu.core_type<tc>, window_params = [{transform_indices = @transform_0, window_bounds = array<i64: 8, 256>}, {pipeline_mode = #tpu.pipeline_mode<synchronous>, transform_indices = @transform_1, window_bounds = array<i64: 256, 256>}, {pipeline_mode = #tpu.pipeline_mode<synchronous>, transform_indices = @transform_2, window_bounds = array<i64: 2, 256>}, {pipeline_mode = #tpu.pipeline_mode<synchronous>, transform_indices = @transform_3, window_bounds = array<i64: 256, 256>}, {pipeline_mode = #tpu.pipeline_mode<synchronous>, transform_indices = @transform_4, window_bounds = array<i64: 2, 256>}, {pipeline_mode = #tpu.pipeline_mode<synchronous>, transform_indices = @transform_5, window_bounds = array<i64: 256, 128>}, {pipeline_mode = #tpu.pipeline_mode<synchronous>, transform_indices = @transform_6, window_bounds = array<i64: 2, 128>}, {pipeline_mode = #tpu.pipeline_mode<synchronous>, transform_indices = @transform_7, window_bounds = array<i64: 128, 128>}, {pipeline_mode = #tpu.pipeline_mode<synchronous>, transform_indices = @transform_8, window_bounds = array<i64: 2, 128>}, {pipeline_mode = #tpu.pipeline_mode<synchronous>, transform_indices = @transform_9, window_bounds = array<i64: 128, 128>}, {pipeline_mode = #tpu.pipeline_mode<synchronous>, transform_indices = @transform_10, window_bounds = array<i64: 2, 128>}, {pipeline_mode = #tpu.pipeline_mode<synchronous>, transform_indices = @transform_11, window_bounds = array<i64: 128, 128>}, {pipeline_mode = #tpu.pipeline_mode<synchronous>, transform_indices = @transform_12, window_bounds = array<i64: 2, 128>}, {pipeline_mode = #tpu.pipeline_mode<synchronous>, transform_indices = @transform_13, window_bounds = array<i64: 128, 128>}, {pipeline_mode = #tpu.pipeline_mode<synchronous>, transform_indices = @transform_14, window_bounds = array<i64: 2, 128>}, {transform_indices = @transform_15, window_bounds = array<i64: 8, 128>}]} {
    %c0 = arith.constant 0 : index
    %c0_0 = arith.constant 0 : index
    %0 = vector.load %arg1[%c0, %c0_0] : memref<8x256xbf16, #tpu.memory_space<vmem>>, vector<8x256xbf16>
    %c0_1 = arith.constant 0 : index
    %c0_2 = arith.constant 0 : index
    %1 = vector.load %arg2[%c0_1, %c0_2] : memref<256x256xi8, #tpu.memory_space<vmem>>, vector<256x256xi8>
    %2 = arith.sitofp %1 : vector<256x256xi8> to vector<256x256xbf16>
    %c0_3 = arith.constant 0 : index
    %c0_4 = arith.constant 0 : index
    %3 = vector.load %arg3[%c0_3, %c0_4] : memref<2x256xf32, #tpu.memory_space<vmem>>, vector<2x256xf32>
    %cst = arith.constant dense<0.000000e+00> : vector<8x256xf32>
    %4 = tpu.matmul %0, %2, %cst {dimension_numbers = #tpu.dot_dimension_numbers<[1], [0], [0], [1], [0, 0, 1, 1], [], []>} : vector<8x256xbf16>, vector<256x256xbf16>, vector<8x256xf32> -> vector<8x256xf32>
    %5 = vector.extract_strided_slice %3 {offsets = [0, 0], sizes = [1, 256], strides = [1, 1]} : vector<2x256xf32> to vector<1x256xf32>
    %6 = vector.broadcast %5 : vector<1x256xf32> to vector<8x256xf32>
    %7 = arith.mulf %4, %6 : vector<8x256xf32>
    %8 = vector.extract_strided_slice %3 {offsets = [1, 0], sizes = [1, 256], strides = [1, 1]} : vector<2x256xf32> to vector<1x256xf32>
    %9 = vector.broadcast %8 : vector<1x256xf32> to vector<8x256xf32>
    %10 = arith.addf %7, %9 : vector<8x256xf32>
    %cst_5 = arith.constant 0.000000e+00 : f32
    %11 = vector.broadcast %cst_5 : f32 to vector<8x256xf32>
    %12 = arith.maximumf %10, %11 : vector<8x256xf32>
    %13 = arith.truncf %12 : vector<8x256xf32> to vector<8x256xbf16>
    %c0_6 = arith.constant 0 : index
    %c0_7 = arith.constant 0 : index
    %14 = vector.load %arg4[%c0_6, %c0_7] : memref<256x256xi8, #tpu.memory_space<vmem>>, vector<256x256xi8>
    %15 = arith.sitofp %14 : vector<256x256xi8> to vector<256x256xbf16>
    %c0_8 = arith.constant 0 : index
    %c0_9 = arith.constant 0 : index
    %16 = vector.load %arg5[%c0_8, %c0_9] : memref<2x256xf32, #tpu.memory_space<vmem>>, vector<2x256xf32>
    %cst_10 = arith.constant dense<0.000000e+00> : vector<8x256xf32>
    %17 = tpu.matmul %13, %15, %cst_10 {dimension_numbers = #tpu.dot_dimension_numbers<[1], [0], [0], [1], [0, 0, 1, 1], [], []>} : vector<8x256xbf16>, vector<256x256xbf16>, vector<8x256xf32> -> vector<8x256xf32>
    %18 = vector.extract_strided_slice %16 {offsets = [0, 0], sizes = [1, 256], strides = [1, 1]} : vector<2x256xf32> to vector<1x256xf32>
    %19 = vector.broadcast %18 : vector<1x256xf32> to vector<8x256xf32>
    %20 = arith.mulf %17, %19 : vector<8x256xf32>
    %21 = vector.extract_strided_slice %16 {offsets = [1, 0], sizes = [1, 256], strides = [1, 1]} : vector<2x256xf32> to vector<1x256xf32>
    %22 = vector.broadcast %21 : vector<1x256xf32> to vector<8x256xf32>
    %23 = arith.addf %20, %22 : vector<8x256xf32>
    %cst_11 = arith.constant 0.000000e+00 : f32
    %24 = vector.broadcast %cst_11 : f32 to vector<8x256xf32>
    %25 = arith.maximumf %23, %24 : vector<8x256xf32>
    %26 = arith.truncf %25 : vector<8x256xf32> to vector<8x256xbf16>
    %c0_12 = arith.constant 0 : index
    %c0_13 = arith.constant 0 : index
    %27 = vector.load %arg6[%c0_12, %c0_13] : memref<256x128xi8, #tpu.memory_space<vmem>>, vector<256x128xi8>
    %28 = arith.sitofp %27 : vector<256x128xi8> to vector<256x128xbf16>
    %c0_14 = arith.constant 0 : index
    %c0_15 = arith.constant 0 : index
    %29 = vector.load %arg7[%c0_14, %c0_15] : memref<2x128xf32, #tpu.memory_space<vmem>>, vector<2x128xf32>
    %cst_16 = arith.constant dense<0.000000e+00> : vector<8x128xf32>
    %30 = tpu.matmul %26, %28, %cst_16 {dimension_numbers = #tpu.dot_dimension_numbers<[1], [0], [0], [1], [0, 0, 1, 1], [], []>} : vector<8x256xbf16>, vector<256x128xbf16>, vector<8x128xf32> -> vector<8x128xf32>
    %31 = vector.extract_strided_slice %29 {offsets = [0, 0], sizes = [1, 128], strides = [1, 1]} : vector<2x128xf32> to vector<1x128xf32>
    %32 = vector.broadcast %31 : vector<1x128xf32> to vector<8x128xf32>
    %33 = arith.mulf %30, %32 : vector<8x128xf32>
    %34 = vector.extract_strided_slice %29 {offsets = [1, 0], sizes = [1, 128], strides = [1, 1]} : vector<2x128xf32> to vector<1x128xf32>
    %35 = vector.broadcast %34 : vector<1x128xf32> to vector<8x128xf32>
    %36 = arith.addf %33, %35 : vector<8x128xf32>
    %cst_17 = arith.constant 0.000000e+00 : f32
    %37 = vector.broadcast %cst_17 : f32 to vector<8x128xf32>
    %38 = arith.maximumf %36, %37 : vector<8x128xf32>
    %39 = arith.truncf %38 : vector<8x128xf32> to vector<8x128xbf16>
    %c0_18 = arith.constant 0 : index
    %c0_19 = arith.constant 0 : index
    %40 = vector.load %arg8[%c0_18, %c0_19] : memref<128x128xi8, #tpu.memory_space<vmem>>, vector<128x128xi8>
    %41 = arith.sitofp %40 : vector<128x128xi8> to vector<128x128xbf16>
    %c0_20 = arith.constant 0 : index
    %c0_21 = arith.constant 0 : index
    %42 = vector.load %arg9[%c0_20, %c0_21] : memref<2x128xf32, #tpu.memory_space<vmem>>, vector<2x128xf32>
    %cst_22 = arith.constant dense<0.000000e+00> : vector<8x128xf32>
    %43 = tpu.matmul %39, %41, %cst_22 {dimension_numbers = #tpu.dot_dimension_numbers<[1], [0], [0], [1], [0, 0, 1, 1], [], []>} : vector<8x128xbf16>, vector<128x128xbf16>, vector<8x128xf32> -> vector<8x128xf32>
    %44 = vector.extract_strided_slice %42 {offsets = [0, 0], sizes = [1, 128], strides = [1, 1]} : vector<2x128xf32> to vector<1x128xf32>
    %45 = vector.broadcast %44 : vector<1x128xf32> to vector<8x128xf32>
    %46 = arith.mulf %43, %45 : vector<8x128xf32>
    %47 = vector.extract_strided_slice %42 {offsets = [1, 0], sizes = [1, 128], strides = [1, 1]} : vector<2x128xf32> to vector<1x128xf32>
    %48 = vector.broadcast %47 : vector<1x128xf32> to vector<8x128xf32>
    %49 = arith.addf %46, %48 : vector<8x128xf32>
    %cst_23 = arith.constant 0.000000e+00 : f32
    %50 = vector.broadcast %cst_23 : f32 to vector<8x128xf32>
    %51 = arith.maximumf %49, %50 : vector<8x128xf32>
    %52 = arith.truncf %51 : vector<8x128xf32> to vector<8x128xbf16>
    %c0_24 = arith.constant 0 : index
    %c0_25 = arith.constant 0 : index
    %53 = vector.load %arg10[%c0_24, %c0_25] : memref<128x128xi8, #tpu.memory_space<vmem>>, vector<128x128xi8>
    %54 = arith.sitofp %53 : vector<128x128xi8> to vector<128x128xbf16>
    %c0_26 = arith.constant 0 : index
    %c0_27 = arith.constant 0 : index
    %55 = vector.load %arg11[%c0_26, %c0_27] : memref<2x128xf32, #tpu.memory_space<vmem>>, vector<2x128xf32>
    %cst_28 = arith.constant dense<0.000000e+00> : vector<8x128xf32>
    %56 = tpu.matmul %52, %54, %cst_28 {dimension_numbers = #tpu.dot_dimension_numbers<[1], [0], [0], [1], [0, 0, 1, 1], [], []>} : vector<8x128xbf16>, vector<128x128xbf16>, vector<8x128xf32> -> vector<8x128xf32>
    %57 = vector.extract_strided_slice %55 {offsets = [0, 0], sizes = [1, 128], strides = [1, 1]} : vector<2x128xf32> to vector<1x128xf32>
    %58 = vector.broadcast %57 : vector<1x128xf32> to vector<8x128xf32>
    %59 = arith.mulf %56, %58 : vector<8x128xf32>
    %60 = vector.extract_strided_slice %55 {offsets = [1, 0], sizes = [1, 128], strides = [1, 1]} : vector<2x128xf32> to vector<1x128xf32>
    %61 = vector.broadcast %60 : vector<1x128xf32> to vector<8x128xf32>
    %62 = arith.addf %59, %61 : vector<8x128xf32>
    %cst_29 = arith.constant 0.000000e+00 : f32
    %63 = vector.broadcast %cst_29 : f32 to vector<8x128xf32>
    %64 = arith.maximumf %62, %63 : vector<8x128xf32>
    %65 = arith.truncf %64 : vector<8x128xf32> to vector<8x128xbf16>
    %c0_30 = arith.constant 0 : index
    %c0_31 = arith.constant 0 : index
    %66 = vector.load %arg12[%c0_30, %c0_31] : memref<128x128xi8, #tpu.memory_space<vmem>>, vector<128x128xi8>
    %67 = arith.sitofp %66 : vector<128x128xi8> to vector<128x128xbf16>
    %c0_32 = arith.constant 0 : index
    %c0_33 = arith.constant 0 : index
    %68 = vector.load %arg13[%c0_32, %c0_33] : memref<2x128xf32, #tpu.memory_space<vmem>>, vector<2x128xf32>
    %cst_34 = arith.constant dense<0.000000e+00> : vector<8x128xf32>
    %69 = tpu.matmul %65, %67, %cst_34 {dimension_numbers = #tpu.dot_dimension_numbers<[1], [0], [0], [1], [0, 0, 1, 1], [], []>} : vector<8x128xbf16>, vector<128x128xbf16>, vector<8x128xf32> -> vector<8x128xf32>
    %70 = vector.extract_strided_slice %68 {offsets = [0, 0], sizes = [1, 128], strides = [1, 1]} : vector<2x128xf32> to vector<1x128xf32>
    %71 = vector.broadcast %70 : vector<1x128xf32> to vector<8x128xf32>
    %72 = arith.mulf %69, %71 : vector<8x128xf32>
    %73 = vector.extract_strided_slice %68 {offsets = [1, 0], sizes = [1, 128], strides = [1, 1]} : vector<2x128xf32> to vector<1x128xf32>
    %74 = vector.broadcast %73 : vector<1x128xf32> to vector<8x128xf32>
    %75 = arith.addf %72, %74 : vector<8x128xf32>
    %cst_35 = arith.constant 0.000000e+00 : f32
    %76 = vector.broadcast %cst_35 : f32 to vector<8x128xf32>
    %77 = arith.maximumf %75, %76 : vector<8x128xf32>
    %78 = arith.truncf %77 : vector<8x128xf32> to vector<8x128xbf16>
    %c0_36 = arith.constant 0 : index
    %c0_37 = arith.constant 0 : index
    %79 = vector.load %arg14[%c0_36, %c0_37] : memref<128x128xi8, #tpu.memory_space<vmem>>, vector<128x128xi8>
    %80 = arith.sitofp %79 : vector<128x128xi8> to vector<128x128xbf16>
    %c0_38 = arith.constant 0 : index
    %c0_39 = arith.constant 0 : index
    %81 = vector.load %arg15[%c0_38, %c0_39] : memref<2x128xf32, #tpu.memory_space<vmem>>, vector<2x128xf32>
    %cst_40 = arith.constant dense<0.000000e+00> : vector<8x128xf32>
    %82 = tpu.matmul %78, %80, %cst_40 {dimension_numbers = #tpu.dot_dimension_numbers<[1], [0], [0], [1], [0, 0, 1, 1], [], []>} : vector<8x128xbf16>, vector<128x128xbf16>, vector<8x128xf32> -> vector<8x128xf32>
    %83 = vector.extract_strided_slice %81 {offsets = [0, 0], sizes = [1, 128], strides = [1, 1]} : vector<2x128xf32> to vector<1x128xf32>
    %84 = vector.broadcast %83 : vector<1x128xf32> to vector<8x128xf32>
    %85 = arith.mulf %82, %84 : vector<8x128xf32>
    %86 = vector.extract_strided_slice %81 {offsets = [1, 0], sizes = [1, 128], strides = [1, 1]} : vector<2x128xf32> to vector<1x128xf32>
    %87 = vector.broadcast %86 : vector<1x128xf32> to vector<8x128xf32>
    %88 = arith.addf %85, %87 : vector<8x128xf32>
    %89 = arith.truncf %88 : vector<8x128xf32> to vector<8x128xbf16>
    %c0_41 = arith.constant 0 : index
    %c0_42 = arith.constant 0 : index
    %90 = vector.load %arg16[%c0_41, %c0_42] : memref<8x128xbf16, #tpu.memory_space<vmem>>, vector<8x128xbf16>
    tpu.vector_store %arg16[%c0_41, %c0_42], %89 {strides = array<i32>} : memref<8x128xbf16, #tpu.memory_space<vmem>>, vector<8x128xbf16>,
    return
  }
  func.func @transform_0(%arg0: i32) -> (i32, i32) {
    %c0_i32 = arith.constant 0 : i32
    %c0_i32_0 = arith.constant 0 : i32
    return %arg0, %c0_i32 : i32, i32
  }
  func.func @transform_1(%arg0: i32) -> (i32, i32) {
    %c0_i32 = arith.constant 0 : i32
    %c0_i32_0 = arith.constant 0 : i32
    %c0_i32_1 = arith.constant 0 : i32
    return %c0_i32, %c0_i32_0 : i32, i32
  }
  func.func @transform_2(%arg0: i32) -> (i32, i32) {
    %c0_i32 = arith.constant 0 : i32
    %c0_i32_0 = arith.constant 0 : i32
    %c0_i32_1 = arith.constant 0 : i32
    return %c0_i32, %c0_i32_0 : i32, i32
  }
  func.func @transform_3(%arg0: i32) -> (i32, i32) {
    %c0_i32 = arith.constant 0 : i32
    %c0_i32_0 = arith.constant 0 : i32
    %c0_i32_1 = arith.constant 0 : i32
    return %c0_i32, %c0_i32_0 : i32, i32
  }
  func.func @transform_4(%arg0: i32) -> (i32, i32) {
    %c0_i32 = arith.constant 0 : i32
    %c0_i32_0 = arith.constant 0 : i32
    %c0_i32_1 = arith.constant 0 : i32
    return %c0_i32, %c0_i32_0 : i32, i32
  }
  func.func @transform_5(%arg0: i32) -> (i32, i32) {
    %c0_i32 = arith.constant 0 : i32
    %c0_i32_0 = arith.constant 0 : i32
    %c0_i32_1 = arith.constant 0 : i32
    return %c0_i32, %c0_i32_0 : i32, i32
  }
  func.func @transform_6(%arg0: i32) -> (i32, i32) {
    %c0_i32 = arith.constant 0 : i32
    %c0_i32_0 = arith.constant 0 : i32
    %c0_i32_1 = arith.constant 0 : i32
    return %c0_i32, %c0_i32_0 : i32, i32
  }
  func.func @transform_7(%arg0: i32) -> (i32, i32) {
    %c0_i32 = arith.constant 0 : i32
    %c0_i32_0 = arith.constant 0 : i32
    %c0_i32_1 = arith.constant 0 : i32
    return %c0_i32, %c0_i32_0 : i32, i32
  }
  func.func @transform_8(%arg0: i32) -> (i32, i32) {
    %c0_i32 = arith.constant 0 : i32
    %c0_i32_0 = arith.constant 0 : i32
    %c0_i32_1 = arith.constant 0 : i32
    return %c0_i32, %c0_i32_0 : i32, i32
  }
  func.func @transform_9(%arg0: i32) -> (i32, i32) {
    %c0_i32 = arith.constant 0 : i32
    %c0_i32_0 = arith.constant 0 : i32
    %c0_i32_1 = arith.constant 0 : i32
    return %c0_i32, %c0_i32_0 : i32, i32
  }
  func.func @transform_10(%arg0: i32) -> (i32, i32) {
    %c0_i32 = arith.constant 0 : i32
    %c0_i32_0 = arith.constant 0 : i32
    %c0_i32_1 = arith.constant 0 : i32
    return %c0_i32, %c0_i32_0 : i32, i32
  }
  func.func @transform_11(%arg0: i32) -> (i32, i32) {
    %c0_i32 = arith.constant 0 : i32
    %c0_i32_0 = arith.constant 0 : i32
    %c0_i32_1 = arith.constant 0 : i32
    return %c0_i32, %c0_i32_0 : i32, i32
  }
  func.func @transform_12(%arg0: i32) -> (i32, i32) {
    %c0_i32 = arith.constant 0 : i32
    %c0_i32_0 = arith.constant 0 : i32
    %c0_i32_1 = arith.constant 0 : i32
    return %c0_i32, %c0_i32_0 : i32, i32
  }
  func.func @transform_13(%arg0: i32) -> (i32, i32) {
    %c0_i32 = arith.constant 0 : i32
    %c0_i32_0 = arith.constant 0 : i32
    %c0_i32_1 = arith.constant 0 : i32
    return %c0_i32, %c0_i32_0 : i32, i32
  }
  func.func @transform_14(%arg0: i32) -> (i32, i32) {
    %c0_i32 = arith.constant 0 : i32
    %c0_i32_0 = arith.constant 0 : i32
    %c0_i32_1 = arith.constant 0 : i32
    return %c0_i32, %c0_i32_0 : i32, i32
  }
  func.func @transform_15(%arg0: i32) -> (i32, i32) {
    %c0_i32 = arith.constant 0 : i32
    %c0_i32_0 = arith.constant 0 : i32
    return %arg0, %c0_i32 : i32, i32
  }
}

module attributes {stable_mosaic.version = 11 : i64} {
  func.func @_fused_mlp_kernel(%arg0: i32, %arg1: memref<8x256xbf16, #tpu.memory_space<vmem>>, %arg2: memref<256x256xi8, #tpu.memory_space<vmem>>, %arg3: memref<2x256xf32, #tpu.memory_space<vmem>>, %arg4: memref<256x256xi8, #tpu.memory_space<vmem>>, %arg5: memref<2x256xf32, #tpu.memory_space<vmem>>, %arg6: memref<256x128xi8, #tpu.memory_space<vmem>>, %arg7: memref<2x128xf32, #tpu.memory_space<vmem>>, %arg8: memref<128x128xi8, #tpu.memory_space<vmem>>, %arg9: memref<2x128xf32, #tpu.memory_space<vmem>>, %arg10: memref<128x128xi8, #tpu.memory_space<vmem>>, %arg11: memref<2x128xf32, #tpu.memory_space<vmem>>, %arg12: memref<128x128xi8, #tpu.memory_space<vmem>>, %arg13: memref<2x128xf32, #tpu.memory_space<vmem>>, %arg14: memref<128x128xi8, #tpu.memory_space<vmem>>, %arg15: memref<2x128xf32, #tpu.memory_space<vmem>>, %arg16: memref<8x128xbf16, #tpu.memory_space<vmem>>) attributes {dimension_semantics = [#tpu.dimension_semantics<arbitrary>], iteration_bounds = array<i64: 1>, scalar_prefetch = 0 : i64, scratch_operands = 0 : i64, tpu.core_type = #tpu.core_type<tc>, window_params = [{transform_indices = @transform_0, window_bounds = array<i64: 8, 256>}, {pipeline_mode = #tpu.pipeline_mode<synchronous>, transform_indices = @transform_1, window_bounds = array<i64: 256, 256>}, {pipeline_mode = #tpu.pipeline_mode<synchronous>, transform_indices = @transform_2, window_bounds = array<i64: 2, 256>}, {pipeline_mode = #tpu.pipeline_mode<synchronous>, transform_indices = @transform_3, window_bounds = array<i64: 256, 256>}, {pipeline_mode = #tpu.pipeline_mode<synchronous>, transform_indices = @transform_4, window_bounds = array<i64: 2, 256>}, {pipeline_mode = #tpu.pipeline_mode<synchronous>, transform_indices = @transform_5, window_bounds = array<i64: 256, 128>}, {pipeline_mode = #tpu.pipeline_mode<synchronous>, transform_indices = @transform_6, window_bounds = array<i64: 2, 128>}, {pipeline_mode = #tpu.pipeline_mode<synchronous>, transform_indices = @transform_7, window_bounds = array<i64: 128, 128>}, {pipeline_mode = #tpu.pipeline_mode<synchronous>, transform_indices = @transform_8, window_bounds = array<i64: 2, 128>}, {pipeline_mode = #tpu.pipeline_mode<synchronous>, transform_indices = @transform_9, window_bounds = array<i64: 128, 128>}, {pipeline_mode = #tpu.pipeline_mode<synchronous>, transform_indices = @transform_10, window_bounds = array<i64: 2, 128>}, {pipeline_mode = #tpu.pipeline_mode<synchronous>, transform_indices = @transform_11, window_bounds = array<i64: 128, 128>}, {pipeline_mode = #tpu.pipeline_mode<synchronous>, transform_indices = @transform_12, window_bounds = array<i64: 2, 128>}, {pipeline_mode = #tpu.pipeline_mode<synchronous>, transform_indices = @transform_13, window_bounds = array<i64: 128, 128>}, {pipeline_mode = #tpu.pipeline_mode<synchronous>, transform_indices = @transform_14, window_bounds = array<i64: 2, 128>}, {transform_indices = @transform_15, window_bounds = array<i64: 8, 128>}]} {
    %c0 = arith.constant 0 : index
    %c0_0 = arith.constant 0 : index
    %0 = vector.load %arg1[%c0, %c0_0] : memref<8x256xbf16, #tpu.memory_space<vmem>>, vector<8x256xbf16>
    %c0_1 = arith.constant 0 : index
    %c0_2 = arith.constant 0 : index
    %1 = vector.load %arg2[%c0_1, %c0_2] : memref<256x256xi8, #tpu.memory_space<vmem>>, vector<256x256xi8>
    %2 = arith.sitofp %1 : vector<256x256xi8> to vector<256x256xbf16>
    %c0_3 = arith.constant 0 : index
    %c0_4 = arith.constant 0 : index
    %3 = vector.load %arg3[%c0_3, %c0_4] : memref<2x256xf32, #tpu.memory_space<vmem>>, vector<2x256xf32>
    %cst = arith.constant dense<0.000000e+00> : vector<8x256xf32>
    %4 = tpu.matmul %0, %2, %cst {dimension_numbers = #tpu.dot_dimension_numbers<[1], [0], [0], [1], [0, 0, 1, 1], [], []>} : vector<8x256xbf16>, vector<256x256xbf16>, vector<8x256xf32> -> vector<8x256xf32>
    %5 = vector.extract_strided_slice %3 {offsets = [0, 0], sizes = [1, 256], strides = [1, 1]} : vector<2x256xf32> to vector<1x256xf32>
    %6 = vector.broadcast %5 : vector<1x256xf32> to vector<8x256xf32>
    %7 = arith.mulf %4, %6 : vector<8x256xf32>
    %8 = vector.extract_strided_slice %3 {offsets = [1, 0], sizes = [1, 256], strides = [1, 1]} : vector<2x256xf32> to vector<1x256xf32>
    %9 = vector.broadcast %8 : vector<1x256xf32> to vector<8x256xf32>
    %10 = arith.addf %7, %9 : vector<8x256xf32>
    %cst_5 = arith.constant 0.000000e+00 : f32
    %11 = vector.broadcast %cst_5 : f32 to vector<8x256xf32>
    %12 = arith.maximumf %10, %11 : vector<8x256xf32>
    %13 = arith.truncf %12 : vector<8x256xf32> to vector<8x256xbf16>
    %c0_6 = arith.constant 0 : index
    %c0_7 = arith.constant 0 : index
    %14 = vector.load %arg4[%c0_6, %c0_7] : memref<256x256xi8, #tpu.memory_space<vmem>>, vector<256x256xi8>
    %15 = arith.sitofp %14 : vector<256x256xi8> to vector<256x256xbf16>
    %c0_8 = arith.constant 0 : index
    %c0_9 = arith.constant 0 : index
    %16 = vector.load %arg5[%c0_8, %c0_9] : memref<2x256xf32, #tpu.memory_space<vmem>>, vector<2x256xf32>
    %cst_10 = arith.constant dense<0.000000e+00> : vector<8x256xf32>
    %17 = tpu.matmul %13, %15, %cst_10 {dimension_numbers = #tpu.dot_dimension_numbers<[1], [0], [0], [1], [0, 0, 1, 1], [], []>} : vector<8x256xbf16>, vector<256x256xbf16>, vector<8x256xf32> -> vector<8x256xf32>
    %18 = vector.extract_strided_slice %16 {offsets = [0, 0], sizes = [1, 256], strides = [1, 1]} : vector<2x256xf32> to vector<1x256xf32>
    %19 = vector.broadcast %18 : vector<1x256xf32> to vector<8x256xf32>
    %20 = arith.mulf %17, %19 : vector<8x256xf32>
    %21 = vector.extract_strided_slice %16 {offsets = [1, 0], sizes = [1, 256], strides = [1, 1]} : vector<2x256xf32> to vector<1x256xf32>
    %22 = vector.broadcast %21 : vector<1x256xf32> to vector<8x256xf32>
    %23 = arith.addf %20, %22 : vector<8x256xf32>
    %cst_11 = arith.constant 0.000000e+00 : f32
    %24 = vector.broadcast %cst_11 : f32 to vector<8x256xf32>
    %25 = arith.maximumf %23, %24 : vector<8x256xf32>
    %26 = arith.truncf %25 : vector<8x256xf32> to vector<8x256xbf16>
    %c0_12 = arith.constant 0 : index
    %c0_13 = arith.constant 0 : index
    %27 = vector.load %arg6[%c0_12, %c0_13] : memref<256x128xi8, #tpu.memory_space<vmem>>, vector<256x128xi8>
    %28 = arith.sitofp %27 : vector<256x128xi8> to vector<256x128xbf16>
    %c0_14 = arith.constant 0 : index
    %c0_15 = arith.constant 0 : index
    %29 = vector.load %arg7[%c0_14, %c0_15] : memref<2x128xf32, #tpu.memory_space<vmem>>, vector<2x128xf32>
    %cst_16 = arith.constant dense<0.000000e+00> : vector<8x128xf32>
    %30 = tpu.matmul %26, %28, %cst_16 {dimension_numbers = #tpu.dot_dimension_numbers<[1], [0], [0], [1], [0, 0, 1, 1], [], []>} : vector<8x256xbf16>, vector<256x128xbf16>, vector<8x128xf32> -> vector<8x128xf32>
    %31 = vector.extract_strided_slice %29 {offsets = [0, 0], sizes = [1, 128], strides = [1, 1]} : vector<2x128xf32> to vector<1x128xf32>
    %32 = vector.broadcast %31 : vector<1x128xf32> to vector<8x128xf32>
    %33 = arith.mulf %30, %32 : vector<8x128xf32>
    %34 = vector.extract_strided_slice %29 {offsets = [1, 0], sizes = [1, 128], strides = [1, 1]} : vector<2x128xf32> to vector<1x128xf32>
    %35 = vector.broadcast %34 : vector<1x128xf32> to vector<8x128xf32>
    %36 = arith.addf %33, %35 : vector<8x128xf32>
    %cst_17 = arith.constant 0.000000e+00 : f32
    %37 = vector.broadcast %cst_17 : f32 to vector<8x128xf32>
    %38 = arith.maximumf %36, %37 : vector<8x128xf32>
    %39 = arith.truncf %38 : vector<8x128xf32> to vector<8x128xbf16>
    %c0_18 = arith.constant 0 : index
    %c0_19 = arith.constant 0 : index
    %40 = vector.load %arg8[%c0_18, %c0_19] : memref<128x128xi8, #tpu.memory_space<vmem>>, vector<128x128xi8>
    %41 = arith.sitofp %40 : vector<128x128xi8> to vector<128x128xbf16>
    %c0_20 = arith.constant 0 : index
    %c0_21 = arith.constant 0 : index
    %42 = vector.load %arg9[%c0_20, %c0_21] : memref<2x128xf32, #tpu.memory_space<vmem>>, vector<2x128xf32>
    %cst_22 = arith.constant dense<0.000000e+00> : vector<8x128xf32>
    %43 = tpu.matmul %39, %41, %cst_22 {dimension_numbers = #tpu.dot_dimension_numbers<[1], [0], [0], [1], [0, 0, 1, 1], [], []>} : vector<8x128xbf16>, vector<128x128xbf16>, vector<8x128xf32> -> vector<8x128xf32>
    %44 = vector.extract_strided_slice %42 {offsets = [0, 0], sizes = [1, 128], strides = [1, 1]} : vector<2x128xf32> to vector<1x128xf32>
    %45 = vector.broadcast %44 : vector<1x128xf32> to vector<8x128xf32>
    %46 = arith.mulf %43, %45 : vector<8x128xf32>
    %47 = vector.extract_strided_slice %42 {offsets = [1, 0], sizes = [1, 128], strides = [1, 1]} : vector<2x128xf32> to vector<1x128xf32>
    %48 = vector.broadcast %47 : vector<1x128xf32> to vector<8x128xf32>
    %49 = arith.addf %46, %48 : vector<8x128xf32>
    %cst_23 = arith.constant 0.000000e+00 : f32
    %50 = vector.broadcast %cst_23 : f32 to vector<8x128xf32>
    %51 = arith.maximumf %49, %50 : vector<8x128xf32>
    %52 = arith.truncf %51 : vector<8x128xf32> to vector<8x128xbf16>
    %c0_24 = arith.constant 0 : index
    %c0_25 = arith.constant 0 : index
    %53 = vector.load %arg10[%c0_24, %c0_25] : memref<128x128xi8, #tpu.memory_space<vmem>>, vector<128x128xi8>
    %54 = arith.sitofp %53 : vector<128x128xi8> to vector<128x128xbf16>
    %c0_26 = arith.constant 0 : index
    %c0_27 = arith.constant 0 : index
    %55 = vector.load %arg11[%c0_26, %c0_27] : memref<2x128xf32, #tpu.memory_space<vmem>>, vector<2x128xf32>
    %cst_28 = arith.constant dense<0.000000e+00> : vector<8x128xf32>
    %56 = tpu.matmul %52, %54, %cst_28 {dimension_numbers = #tpu.dot_dimension_numbers<[1], [0], [0], [1], [0, 0, 1, 1], [], []>} : vector<8x128xbf16>, vector<128x128xbf16>, vector<8x128xf32> -> vector<8x128xf32>
    %57 = vector.extract_strided_slice %55 {offsets = [0, 0], sizes = [1, 128], strides = [1, 1]} : vector<2x128xf32> to vector<1x128xf32>
    %58 = vector.broadcast %57 : vector<1x128xf32> to vector<8x128xf32>
    %59 = arith.mulf %56, %58 : vector<8x128xf32>
    %60 = vector.extract_strided_slice %55 {offsets = [1, 0], sizes = [1, 128], strides = [1, 1]} : vector<2x128xf32> to vector<1x128xf32>
    %61 = vector.broadcast %60 : vector<1x128xf32> to vector<8x128xf32>
    %62 = arith.addf %59, %61 : vector<8x128xf32>
    %cst_29 = arith.constant 0.000000e+00 : f32
    %63 = vector.broadcast %cst_29 : f32 to vector<8x128xf32>
    %64 = arith.maximumf %62, %63 : vector<8x128xf32>
    %65 = arith.truncf %64 : vector<8x128xf32> to vector<8x128xbf16>
    %c0_30 = arith.constant 0 : index
    %c0_31 = arith.constant 0 : index
    %66 = vector.load %arg12[%c0_30, %c0_31] : memref<128x128xi8, #tpu.memory_space<vmem>>, vector<128x128xi8>
    %67 = arith.sitofp %66 : vector<128x128xi8> to vector<128x128xbf16>
    %c0_32 = arith.constant 0 : index
    %c0_33 = arith.constant 0 : index
    %68 = vector.load %arg13[%c0_32, %c0_33] : memref<2x128xf32, #tpu.memory_space<vmem>>, vector<2x128xf32>
    %cst_34 = arith.constant dense<0.000000e+00> : vector<8x128xf32>
    %69 = tpu.matmul %65, %67, %cst_34 {dimension_numbers = #tpu.dot_dimension_numbers<[1], [0], [0], [1], [0, 0, 1, 1], [], []>} : vector<8x128xbf16>, vector<128x128xbf16>, vector<8x128xf32> -> vector<8x128xf32>
    %70 = vector.extract_strided_slice %68 {offsets = [0, 0], sizes = [1, 128], strides = [1, 1]} : vector<2x128xf32> to vector<1x128xf32>
    %71 = vector.broadcast %70 : vector<1x128xf32> to vector<8x128xf32>
    %72 = arith.mulf %69, %71 : vector<8x128xf32>
    %73 = vector.extract_strided_slice %68 {offsets = [1, 0], sizes = [1, 128], strides = [1, 1]} : vector<2x128xf32> to vector<1x128xf32>
    %74 = vector.broadcast %73 : vector<1x128xf32> to vector<8x128xf32>
    %75 = arith.addf %72, %74 : vector<8x128xf32>
    %cst_35 = arith.constant 0.000000e+00 : f32
    %76 = vector.broadcast %cst_35 : f32 to vector<8x128xf32>
    %77 = arith.maximumf %75, %76 : vector<8x128xf32>
    %78 = arith.truncf %77 : vector<8x128xf32> to vector<8x128xbf16>
    %c0_36 = arith.constant 0 : index
    %c0_37 = arith.constant 0 : index
    %79 = vector.load %arg14[%c0_36, %c0_37] : memref<128x128xi8, #tpu.memory_space<vmem>>, vector<128x128xi8>
    %80 = arith.sitofp %79 : vector<128x128xi8> to vector<128x128xbf16>
    %c0_38 = arith.constant 0 : index
    %c0_39 = arith.constant 0 : index
    %81 = vector.load %arg15[%c0_38, %c0_39] : memref<2x128xf32, #tpu.memory_space<vmem>>, vector<2x128xf32>
    %cst_40 = arith.constant dense<0.000000e+00> : vector<8x128xf32>
    %82 = tpu.matmul %78, %80, %cst_40 {dimension_numbers = #tpu.dot_dimension_numbers<[1], [0], [0], [1], [0, 0, 1, 1], [], []>} : vector<8x128xbf16>, vector<128x128xbf16>, vector<8x128xf32> -> vector<8x128xf32>
    %83 = vector.extract_strided_slice %81 {offsets = [0, 0], sizes = [1, 128], strides = [1, 1]} : vector<2x128xf32> to vector<1x128xf32>
    %84 = vector.broadcast %83 : vector<1x128xf32> to vector<8x128xf32>
    %85 = arith.mulf %82, %84 : vector<8x128xf32>
    %86 = vector.extract_strided_slice %81 {offsets = [1, 0], sizes = [1, 128], strides = [1, 1]} : vector<2x128xf32> to vector<1x128xf32>
    %87 = vector.broadcast %86 : vector<1x128xf32> to vector<8x128xf32>
    %88 = arith.addf %85, %87 : vector<8x128xf32>
    %89 = arith.truncf %88 : vector<8x128xf32> to vector<8x128xbf16>
    %c0_41 = arith.constant 0 : index
    %c0_42 = arith.constant 0 : index
    %90 = vector.load %arg16[%c0_41, %c0_42] : memref<8x128xbf16, #tpu.memory_space<vmem>>, vector<8x128xbf16>
    tpu.vector_store %arg16[%c0_41, %c0_42], %89 {strides = array<i32>} : memref<8x128xbf16, #tpu.memory_space<vmem>>, vector<8x128xbf16>,
    return
  }
  func.func @transform_0(%arg0: i32) -> (i32, i32) {
    %c0_i32 = arith.constant 0 : i32
    %c0_i32_0 = arith.constant 0 : i32
    return %arg0, %c0_i32 : i32, i32
  }
  func.func @transform_1(%arg0: i32) -> (i32, i32) {
    %c0_i32 = arith.constant 0 : i32
    %c0_i32_0 = arith.constant 0 : i32
    %c0_i32_1 = arith.constant 0 : i32
    return %c0_i32, %c0_i32_0 : i32, i32
  }
  func.func @transform_2(%arg0: i32) -> (i32, i32) {
    %c0_i32 = arith.constant 0 : i32
    %c0_i32_0 = arith.constant 0 : i32
    %c0_i32_1 = arith.constant 0 : i32
    return %c0_i32, %c0_i32_0 : i32, i32
  }
  func.func @transform_3(%arg0: i32) -> (i32, i32) {
    %c0_i32 = arith.constant 0 : i32
    %c0_i32_0 = arith.constant 0 : i32
    %c0_i32_1 = arith.constant 0 : i32
    return %c0_i32, %c0_i32_0 : i32, i32
  }
  func.func @transform_4(%arg0: i32) -> (i32, i32) {
    %c0_i32 = arith.constant 0 : i32
    %c0_i32_0 = arith.constant 0 : i32
    %c0_i32_1 = arith.constant 0 : i32
    return %c0_i32, %c0_i32_0 : i32, i32
  }
  func.func @transform_5(%arg0: i32) -> (i32, i32) {
    %c0_i32 = arith.constant 0 : i32
    %c0_i32_0 = arith.constant 0 : i32
    %c0_i32_1 = arith.constant 0 : i32
    return %c0_i32, %c0_i32_0 : i32, i32
  }
  func.func @transform_6(%arg0: i32) -> (i32, i32) {
    %c0_i32 = arith.constant 0 : i32
    %c0_i32_0 = arith.constant 0 : i32
    %c0_i32_1 = arith.constant 0 : i32
    return %c0_i32, %c0_i32_0 : i32, i32
  }
  func.func @transform_7(%arg0: i32) -> (i32, i32) {
    %c0_i32 = arith.constant 0 : i32
    %c0_i32_0 = arith.constant 0 : i32
    %c0_i32_1 = arith.constant 0 : i32
    return %c0_i32, %c0_i32_0 : i32, i32
  }
  func.func @transform_8(%arg0: i32) -> (i32, i32) {
    %c0_i32 = arith.constant 0 : i32
    %c0_i32_0 = arith.constant 0 : i32
    %c0_i32_1 = arith.constant 0 : i32
    return %c0_i32, %c0_i32_0 : i32, i32
  }
  func.func @transform_9(%arg0: i32) -> (i32, i32) {
    %c0_i32 = arith.constant 0 : i32
    %c0_i32_0 = arith.constant 0 : i32
    %c0_i32_1 = arith.constant 0 : i32
    return %c0_i32, %c0_i32_0 : i32, i32
  }
  func.func @transform_10(%arg0: i32) -> (i32, i32) {
    %c0_i32 = arith.constant 0 : i32
    %c0_i32_0 = arith.constant 0 : i32
    %c0_i32_1 = arith.constant 0 : i32
    return %c0_i32, %c0_i32_0 : i32, i32
  }
  func.func @transform_11(%arg0: i32) -> (i32, i32) {
    %c0_i32 = arith.constant 0 : i32
    %c0_i32_0 = arith.constant 0 : i32
    %c0_i32_1 = arith.constant 0 : i32
    return %c0_i32, %c0_i32_0 : i32, i32
  }
  func.func @transform_12(%arg0: i32) -> (i32, i32) {
    %c0_i32 = arith.constant 0 : i32
    %c0_i32_0 = arith.constant 0 : i32
    %c0_i32_1 = arith.constant 0 : i32
    return %c0_i32, %c0_i32_0 : i32, i32
  }
  func.func @transform_13(%arg0: i32) -> (i32, i32) {
    %c0_i32 = arith.constant 0 : i32
    %c0_i32_0 = arith.constant 0 : i32
    %c0_i32_1 = arith.constant 0 : i32
    return %c0_i32, %c0_i32_0 : i32, i32
  }
  func.func @transform_14(%arg0: i32) -> (i32, i32) {
    %c0_i32 = arith.constant 0 : i32
    %c0_i32_0 = arith.constant 0 : i32
    %c0_i32_1 = arith.constant 0 : i32
    return %c0_i32, %c0_i32_0 : i32, i32
  }
  func.func @transform_15(%arg0: i32) -> (i32, i32) {
    %c0_i32 = arith.constant 0 : i32
    %c0_i32_0 = arith.constant 0 : i32
    return %arg0, %c0_i32 : i32, i32
  }
}

</mosaic_0001>

<llo_original>
// kernel: tpu_custom_call.1
$region0: #{tpu_custom_call.1}
  #allocation0 [shape = 'u32[]', space=smem, size = 0x4, offset = 0x4, fixed_abs, tag = 'smem constant byte address 0x4 - core index']
  #allocation1 [shape = 'u32[144,128]{1,0:T(1,128)}', space=vmem, size = 0x12000, scoped, tag = 'internal scratch']
  %s0 = inlined_call_operand.hbm [shape: bf16[8,256], index: 0, kind: input, shape index: {}]
  %s1 = inlined_call_operand.hbm [shape: s8[256,256], index: 1, kind: input, shape index: {}]
  %s2 = inlined_call_operand.hbm [shape: f32[2,256], index: 2, kind: input, shape index: {}]
  %s3 = inlined_call_operand.hbm [shape: s8[256,256], index: 3, kind: input, shape index: {}]
  %s4 = inlined_call_operand.hbm [shape: f32[2,256], index: 4, kind: input, shape index: {}]
  %s5 = inlined_call_operand.hbm [shape: s8[256,128], index: 5, kind: input, shape index: {}]
  %s6 = inlined_call_operand.vmem [shape: f32[2,128], index: 6, kind: input, shape index: {}]
  %s7 = inlined_call_operand.hbm [shape: s8[128,128], index: 7, kind: input, shape index: {}]
  %s8 = inlined_call_operand.hbm [shape: f32[2,128], index: 8, kind: input, shape index: {}]
  %s9 = inlined_call_operand.vmem [shape: s8[128,128], index: 9, kind: input, shape index: {}]
  %s10 = inlined_call_operand.vmem [shape: f32[2,128], index: 10, kind: input, shape index: {}]
  %s11 = inlined_call_operand.hbm [shape: s8[128,128], index: 11, kind: input, shape index: {}]
  %s12 = inlined_call_operand.vmem [shape: f32[2,128], index: 12, kind: input, shape index: {}]
  %s13 = inlined_call_operand.hbm [shape: s8[128,128], index: 13, kind: input, shape index: {}]
  %s14 = inlined_call_operand.vmem [shape: f32[2,128], index: 14, kind: input, shape index: {}]
  %s15 = inlined_call_operand.hbm [shape: bf16[8,128], index: 15, kind: output, shape index: {}]
  %s16 = sld [smem:[#allocation0]]
  $region110: #{tpu_custom_call.1} parent=0
    _
  %s18 = ssub.s32 1, %s16
  %s19 = scalar_select 0, %s18, %s16
  $region1: #{tpu_custom_call.1} parent=0
    #allocation2 [shape = 'u8[4096]{0}', space=vmem, size = 0x1000, scoped, tag = 'input window, operand 0, single buffered']
    #allocation3 [shape = 's32[1]{0}', space=sflag, size = 0x4, scoped, tag = 'scoped memory for tpu_custom_call.1']
    #allocation4 [shape = 's32[1]{0}', space=sflag, size = 0x4, scoped, tag = 'scoped memory for tpu_custom_call.1']
    #allocation5 [shape = 'u8[65536]{0}', space=vmem, size = 0x10000, scoped, tag = 'input window, operand 1, single buffered']
    #allocation6 [shape = 's32[1]{0}', space=sflag, size = 0x4, scoped, tag = 'scoped memory for tpu_custom_call.1']
    #allocation7 [shape = 'u8[2048]{0}', space=vmem, size = 0x800, scoped, tag = 'input window, operand 2, single buffered']
    #allocation8 [shape = 'u8[65536]{0}', space=vmem, size = 0x10000, scoped, tag = 'input window, operand 3, single buffered']
    #allocation9 [shape = 's32[1]{0}', space=sflag, size = 0x4, scoped, tag = 'scoped memory for tpu_custom_call.1']
    #allocation10 [shape = 'u8[2048]{0}', space=vmem, size = 0x800, scoped, tag = 'input window, operand 4, single buffered']
    #allocation11 [shape = 'u8[32768]{0}', space=vmem, size = 0x8000, scoped, tag = 'input window, operand 5, single buffered']
    #allocation12 [shape = 's32[1]{0}', space=sflag, size = 0x4, scoped, tag = 'scoped memory for tpu_custom_call.1']
    #allocation13 [shape = 'u8[16384]{0}', space=vmem, size = 0x4000, scoped, tag = 'input window, operand 7, single buffered']
    #allocation14 [shape = 'u8[1024]{0}', space=vmem, size = 0x400, scoped, tag = 'input window, operand 8, single buffered']
    #allocation15 [shape = 's32[1]{0}', space=sflag, size = 0x4, scoped, tag = 'scoped memory for tpu_custom_call.1']
    #allocation16 [shape = 'u8[16384]{0}', space=vmem, size = 0x4000, scoped, tag = 'input window, operand 11, single buffered']
    #allocation17 [shape = 'u8[16384]{0}', space=vmem, size = 0x4000, scoped, tag = 'input window, operand 13, single buffered']
    #allocation18 [shape = 's32[1]{0}', space=sflag, size = 0x4, scoped, tag = 'scoped memory for tpu_custom_call.1']
    #allocation19 [shape = 'u8[2048]{0}', space=vmem, size = 0x800, scoped, tag = 'output window, operand 0, single buffered']
    %20 = vsyncpa [#allocation3], 0
    %21 = vsyncpa [#allocation6], 0
    %22 = vsyncpa [#allocation9], 0
    %23 = vsyncpa [#allocation12], 0
    %24 = vsyncpa [#allocation15], 0
    %25 = vsyncpa [#allocation18], 0
    %26 = vsyncpa [#allocation4], 0
    // Predicated region
    $region2: #{tpu_custom_call.1} parent=1 // pred_check
      _
    $region3: #{tpu_custom_call.1} parent=1 // pred_check_branch
      %28 = sbr.rel (0) target = $region5
    $region4: #{tpu_custom_call.1} parent=1 // pred_region
      %s30 = ssub.s32 128, 128
      %31 = vsyncadd [#allocation3], %s30
      %s33 = sshll.u32 [#allocation2], 4
      %s34 = int_to_ptr.vmem [resolvable:$true] %s33
      %36 = dma.hbm_to_vmem [thread:$0]  %s0, 128, %s34, [#allocation3]
    $region5: #{tpu_custom_call.1} parent=1 // pred_fallthru
      _
    // Predicated region
    $region6: #{tpu_custom_call.1} parent=1 // pred_check
      _
    $region7: #{tpu_custom_call.1} parent=1 // pred_check_branch
      %38 = sbr.rel (0) target = $region9
    $region8: #{tpu_custom_call.1} parent=1 // pred_region
      %s40 = ssub.s32 2048, 2048
      %41 = vsyncadd [#allocation6], %s40
      %s42 = sshll.u32 [#allocation5], 4
      %s43 = int_to_ptr.vmem [resolvable:$true] %s42
      %48 = dma.hbm_to_vmem [thread:$0]  %s1, 2048, %s43, [#allocation6], 256, 256, 16
    $region9: #{tpu_custom_call.1} parent=1 // pred_fallthru
      _
    // Predicated region
    $region10: #{tpu_custom_call.1} parent=1 // pred_check
      _
    $region11: #{tpu_custom_call.1} parent=1 // pred_check_branch
      %50 = sbr.rel (0) target = $region13
    $region12: #{tpu_custom_call.1} parent=1 // pred_region
      %s52 = ssub.s32 64, 64
      %53 = vsyncadd [#allocation6], %s52
      %s55 = sshll.u32 [#allocation7], 4
      %s56 = int_to_ptr.vmem [resolvable:$true] %s55
      %58 = dma.hbm_to_vmem [thread:$0]  %s2, 64, %s56, [#allocation6]
    $region13: #{tpu_custom_call.1} parent=1 // pred_fallthru
      _
    // Predicated region
    $region14: #{tpu_custom_call.1} parent=1 // pred_check
      _
    $region15: #{tpu_custom_call.1} parent=1 // pred_check_branch
      %60 = sbr.rel (0) target = $region17
    $region16: #{tpu_custom_call.1} parent=1 // pred_region
      %s62 = ssub.s32 2048, 2048
      %63 = vsyncadd [#allocation9], %s62
      %s64 = sshll.u32 [#allocation8], 4
      %s65 = int_to_ptr.vmem [resolvable:$true] %s64
      %70 = dma.hbm_to_vmem [thread:$0]  %s3, 2048, %s65, [#allocation9], 256, 256, 16
    $region17: #{tpu_custom_call.1} parent=1 // pred_fallthru
      _
    // Predicated region
    $region18: #{tpu_custom_call.1} parent=1 // pred_check
      _
    $region19: #{tpu_custom_call.1} parent=1 // pred_check_branch
      %72 = sbr.rel (0) target = $region21
    $region20: #{tpu_custom_call.1} parent=1 // pred_region
      %s74 = ssub.s32 64, 64
      %75 = vsyncadd [#allocation9], %s74
      %s77 = sshll.u32 [#allocation10], 4
      %s78 = int_to_ptr.vmem [resolvable:$true] %s77
      %80 = dma.hbm_to_vmem [thread:$0]  %s4, 64, %s78, [#allocation9]
    $region21: #{tpu_custom_call.1} parent=1 // pred_fallthru
      _
    // Predicated region
    $region22: #{tpu_custom_call.1} parent=1 // pred_check
      _
    $region23: #{tpu_custom_call.1} parent=1 // pred_check_branch
      %82 = sbr.rel (0) target = $region25
    $region24: #{tpu_custom_call.1} parent=1 // pred_region
      %s84 = ssub.s32 1024, 1024
      %85 = vsyncadd [#allocation12], %s84
      %s86 = sshll.u32 [#allocation11], 4
      %s87 = int_to_ptr.vmem [resolvable:$true] %s86
      %92 = dma.hbm_to_vmem [thread:$0]  %s5, 1024, %s87, [#allocation12], 128, 128, 8
    $region25: #{tpu_custom_call.1} parent=1 // pred_fallthru
      _
    // Predicated region
    $region26: #{tpu_custom_call.1} parent=1 // pred_check
      _
    $region27: #{tpu_custom_call.1} parent=1 // pred_check_branch
      %94 = sbr.rel (0) target = $region29
    $region28: #{tpu_custom_call.1} parent=1 // pred_region
      _
    $region29: #{tpu_custom_call.1} parent=1 // pred_fallthru
      _
    // Predicated region
    $region30: #{tpu_custom_call.1} parent=1 // pred_check
      _
    $region31: #{tpu_custom_call.1} parent=1 // pred_check_branch
      %96 = sbr.rel (0) target = $region33
    $region32: #{tpu_custom_call.1} parent=1 // pred_region
      %s98 = ssub.s32 512, 512
      %99 = vsyncadd [#allocation12], %s98
      %s100 = sshll.u32 [#allocation13], 4
      %s101 = int_to_ptr.vmem [resolvable:$true] %s100
      %106 = dma.hbm_to_vmem [thread:$0]  %s7, 512, %s101, [#allocation12], 128, 128, 8
    $region33: #{tpu_custom_call.1} parent=1 // pred_fallthru
      _
    // Predicated region
    $region34: #{tpu_custom_call.1} parent=1 // pred_check
      _
    $region35: #{tpu_custom_call.1} parent=1 // pred_check_branch
      %108 = sbr.rel (0) target = $region37
    $region36: #{tpu_custom_call.1} parent=1 // pred_region
      %s110 = ssub.s32 32, 32
      %111 = vsyncadd [#allocation15], %s110
      %s113 = sshll.u32 [#allocation14], 4
      %s114 = int_to_ptr.vmem [resolvable:$true] %s113
      %116 = dma.hbm_to_vmem [thread:$0]  %s8, 32, %s114, [#allocation15]
    $region37: #{tpu_custom_call.1} parent=1 // pred_fallthru
      _
    // Predicated region
    $region38: #{tpu_custom_call.1} parent=1 // pred_check
      _
    $region39: #{tpu_custom_call.1} parent=1 // pred_check_branch
      %118 = sbr.rel (0) target = $region41
    $region40: #{tpu_custom_call.1} parent=1 // pred_region
      _
    $region41: #{tpu_custom_call.1} parent=1 // pred_fallthru
      _
    // Predicated region
    $region42: #{tpu_custom_call.1} parent=1 // pred_check
      _
    $region43: #{tpu_custom_call.1} parent=1 // pred_check_branch
      %120 = sbr.rel (0) target = $region45
    $region44: #{tpu_custom_call.1} parent=1 // pred_region
      _
    $region45: #{tpu_custom_call.1} parent=1 // pred_fallthru
      _
    // Predicated region
    $region46: #{tpu_custom_call.1} parent=1 // pred_check
      _
    $region47: #{tpu_custom_call.1} parent=1 // pred_check_branch
      %122 = sbr.rel (0) target = $region49
    $region48: #{tpu_custom_call.1} parent=1 // pred_region
      %s124 = ssub.s32 512, 512
      %125 = vsyncadd [#allocation15], %s124
      %s126 = sshll.u32 [#allocation16], 4
      %s127 = int_to_ptr.vmem [resolvable:$true] %s126
      %132 = dma.hbm_to_vmem [thread:$0]  %s11, 512, %s127, [#allocation15], 128, 128, 8
    $region49: #{tpu_custom_call.1} parent=1 // pred_fallthru
      _
    // Predicated region
    $region50: #{tpu_custom_call.1} parent=1 // pred_check
      _
    $region51: #{tpu_custom_call.1} parent=1 // pred_check_branch
      %134 = sbr.rel (0) target = $region53
    $region52: #{tpu_custom_call.1} parent=1 // pred_region
      _
    $region53: #{tpu_custom_call.1} parent=1 // pred_fallthru
      _
    // Predicated region
    $region54: #{tpu_custom_call.1} parent=1 // pred_check
      _
    $region55: #{tpu_custom_call.1} parent=1 // pred_check_branch
      %136 = sbr.rel (0) target = $region57
    $region56: #{tpu_custom_call.1} parent=1 // pred_region
      %s138 = ssub.s32 512, 512
      %139 = vsyncadd [#allocation18], %s138
      %s140 = sshll.u32 [#allocation17], 4
      %s141 = int_to_ptr.vmem [resolvable:$true] %s140
      %146 = dma.hbm_to_vmem [thread:$0]  %s13, 512, %s141, [#allocation18], 128, 128, 8
    $region57: #{tpu_custom_call.1} parent=1 // pred_fallthru
      _
    // Predicated region
    $region58: #{tpu_custom_call.1} parent=1 // pred_check
      _
    $region59: #{tpu_custom_call.1} parent=1 // pred_check_branch
      %148 = sbr.rel (0) target = $region61
    $region60: #{tpu_custom_call.1} parent=1 // pred_region
      _
    $region61: #{tpu_custom_call.1} parent=1 // pred_fallthru
      _
    // Predicated region
    $region62: #{tpu_custom_call.1} parent=1 // pred_check
      _
    $region63: #{tpu_custom_call.1} parent=1 // pred_check_branch
      %150 = sbr.rel (0) target = $region65
    $region64: #{tpu_custom_call.1} parent=1 // pred_region
      %151 = dma.done [#allocation3], 128
    $region65: #{tpu_custom_call.1} parent=1 // pred_fallthru
      _
    // Predicated region
    $region66: #{tpu_custom_call.1} parent=1 // pred_check
      _
    $region67: #{tpu_custom_call.1} parent=1 // pred_check_branch
      %153 = sbr.rel (0) target = $region69
    $region68: #{tpu_custom_call.1} parent=1 // pred_region
      %154 = dma.done [#allocation6], 2048
    $region69: #{tpu_custom_call.1} parent=1 // pred_fallthru
      _
    // Predicated region
    $region70: #{tpu_custom_call.1} parent=1 // pred_check
      _
    $region71: #{tpu_custom_call.1} parent=1 // pred_check_branch
      %156 = sbr.rel (0) target = $region73
    $region72: #{tpu_custom_call.1} parent=1 // pred_region
      %157 = dma.done [#allocation6], 64
    $region73: #{tpu_custom_call.1} parent=1 // pred_fallthru
      _
    // Predicated region
    $region74: #{tpu_custom_call.1} parent=1 // pred_check
      _
    $region75: #{tpu_custom_call.1} parent=1 // pred_check_branch
      %159 = sbr.rel (0) target = $region77
    $region76: #{tpu_custom_call.1} parent=1 // pred_region
      %160 = dma.done [#allocation9], 2048
    $region77: #{tpu_custom_call.1} parent=1 // pred_fallthru
      _
    // Predicated region
    $region78: #{tpu_custom_call.1} parent=1 // pred_check
      _
    $region79: #{tpu_custom_call.1} parent=1 // pred_check_branch
      %162 = sbr.rel (0) target = $region81
    $region80: #{tpu_custom_call.1} parent=1 // pred_region
      %163 = dma.done [#allocation9], 64
    $region81: #{tpu_custom_call.1} parent=1 // pred_fallthru
      _
    // Predicated region
    $region82: #{tpu_custom_call.1} parent=1 // pred_check
      _
    $region83: #{tpu_custom_call.1} parent=1 // pred_check_branch
      %165 = sbr.rel (0) target = $region85
    $region84: #{tpu_custom_call.1} parent=1 // pred_region
      %166 = dma.done [#allocation12], 1024
    $region85: #{tpu_custom_call.1} parent=1 // pred_fallthru
      _
    // Predicated region
    $region86: #{tpu_custom_call.1} parent=1 // pred_check
      _
    $region87: #{tpu_custom_call.1} parent=1 // pred_check_branch
      %168 = sbr.rel (0) target = $region89
    $region88: #{tpu_custom_call.1} parent=1 // pred_region
      %169 = dma.done [#allocation12], 512
    $region89: #{tpu_custom_call.1} parent=1 // pred_fallthru
      _
    // Predicated region
    $region90: #{tpu_custom_call.1} parent=1 // pred_check
      _
    $region91: #{tpu_custom_call.1} parent=1 // pred_check_branch
      %171 = sbr.rel (0) target = $region93
    $region92: #{tpu_custom_call.1} parent=1 // pred_region
      %172 = dma.done [#allocation15], 32
    $region93: #{tpu_custom_call.1} parent=1 // pred_fallthru
      _
    // Predicated region
    $region94: #{tpu_custom_call.1} parent=1 // pred_check
      _
    $region95: #{tpu_custom_call.1} parent=1 // pred_check_branch
      %174 = sbr.rel (0) target = $region97
    $region96: #{tpu_custom_call.1} parent=1 // pred_region
      %175 = dma.done [#allocation15], 512
    $region97: #{tpu_custom_call.1} parent=1 // pred_fallthru
      _
    // Predicated region
    $region98: #{tpu_custom_call.1} parent=1 // pred_check
      _
    $region99: #{tpu_custom_call.1} parent=1 // pred_check_branch
      %177 = sbr.rel (0) target = $region101
    $region100: #{tpu_custom_call.1} parent=1 // pred_region
      %178 = dma.done [#allocation18], 512
    $region101: #{tpu_custom_call.1} parent=1 // pred_fallthru
      _
    %v180 = vld [vmem:[#allocation2] sm:$0xff]
    %v181 = vld [vmem:[#allocation5] sm:$0xff]
    %v182 = vld [vmem:[#allocation5 + $0x8] sm:$0xff]
    %v183 = vld [vmem:[#allocation5 + $0x10] sm:$0xff]
    %v184 = vld [vmem:[#allocation5 + $0x18] sm:$0xff]
    %v185 = vld [vmem:[#allocation5 + $0x20] sm:$0xff]
    %v186 = vld [vmem:[#allocation5 + $0x28] sm:$0xff]
    %v187 = vld [vmem:[#allocation5 + $0x30] sm:$0xff]
    %v188 = vld [vmem:[#allocation5 + $0x38] sm:$0xff]
    %v189 = vld [vmem:[#allocation5 + $0x40] sm:$0xff]
    %v190 = vld [vmem:[#allocation5 + $0x48] sm:$0xff]
    %v191 = vld [vmem:[#allocation5 + $0x50] sm:$0xff]
    %v192 = vld [vmem:[#allocation5 + $0x58] sm:$0xff]
    %v193 = vld [vmem:[#allocation5 + $0x60] sm:$0xff]
    %v194 = vld [vmem:[#allocation5 + $0x68] sm:$0xff]
    %v195 = vld [vmem:[#allocation5 + $0x70] sm:$0xff]
    %v196 = vld [vmem:[#allocation5 + $0x78] sm:$0xff]
    %v197 = vunpack.c.l.s8.bf16 %v181
    %v198 = vunpack.c.l.s8.bf16 %v182
    %v199 = vunpack.c.h.s8.bf16 %v181
    %v200 = vunpack.c.h.s8.bf16 %v182
    %v201 = vunpack.c.l.s8.bf16 %v183
    %v202 = vunpack.c.l.s8.bf16 %v184
    %v203 = vunpack.c.h.s8.bf16 %v183
    %v204 = vunpack.c.h.s8.bf16 %v184
    %v205 = vunpack.c.l.s8.bf16 %v185
    %v206 = vunpack.c.l.s8.bf16 %v186
    %v207 = vunpack.c.h.s8.bf16 %v185
    %v208 = vunpack.c.h.s8.bf16 %v186
    %v209 = vunpack.c.l.s8.bf16 %v187
    %v210 = vunpack.c.l.s8.bf16 %v188
    %v211 = vunpack.c.h.s8.bf16 %v187
    %v212 = vunpack.c.h.s8.bf16 %v188
    %v213 = vunpack.c.l.s8.bf16 %v189
    %v214 = vunpack.c.l.s8.bf16 %v190
    %v215 = vunpack.c.h.s8.bf16 %v189
    %v216 = vunpack.c.h.s8.bf16 %v190
    %v217 = vunpack.c.l.s8.bf16 %v191
    %v218 = vunpack.c.l.s8.bf16 %v192
    %v219 = vunpack.c.h.s8.bf16 %v191
    %v220 = vunpack.c.h.s8.bf16 %v192
    %v221 = vunpack.c.l.s8.bf16 %v193
    %v222 = vunpack.c.l.s8.bf16 %v194
    %v223 = vunpack.c.h.s8.bf16 %v193
    %v224 = vunpack.c.h.s8.bf16 %v194
    %v225 = vunpack.c.l.s8.bf16 %v195
    %v226 = vunpack.c.l.s8.bf16 %v196
    %v227 = vunpack.c.h.s8.bf16 %v195
    %v228 = vunpack.c.h.s8.bf16 %v196
    %v229 = vld [vmem:[#allocation7] sm:$0xf]
    %v231 = vunpack.c.l.b16 %v180
    %v232 = vunpack.c.h.b16 %v180
    %v233 = vpack.c.b16 %v231, %v231
    %v234 = vpack.c.b16 %v232, %v232
    %237 = vmatprep.subr.bf16.mxu0 %v198
    %238 = vmatpush1.bf16.msra.mxu0 %v197
    %239 = vmatprep.subr.bf16.mxu0 %v200
    %240 = vmatpush1.bf16.msra.mxu0 %v199
    %241 = vmatprep.subr.bf16.mxu0 %v202
    %242 = vmatpush1.bf16.msra.mxu0 %v201
    %243 = vmatprep.subr.bf16.mxu0 %v204
    %244 = vmatpush1.bf16.msra.mxu0 %v203
    %245 = vmatprep.subr.bf16.mxu0 %v206
    %246 = vmatpush1.bf16.msra.mxu0 %v205
    %247 = vmatprep.subr.bf16.mxu0 %v208
    %248 = vmatpush1.bf16.msra.mxu0 %v207
    %249 = vmatprep.subr.bf16.mxu0 %v210
    %250 = vmatpush1.bf16.msra.mxu0 %v209
    %251 = vmatprep.subr.bf16.mxu0 %v212
    %252 = vmatpush1.bf16.msra.mxu0 %v211
    %253 = vmatprep.subr.bf16.mxu0 %v214
    %254 = vmatpush1.bf16.msra.mxu0 %v213
    %255 = vmatprep.subr.bf16.mxu0 %v216
    %256 = vmatpush1.bf16.msra.mxu0 %v215
    %257 = vmatprep.subr.bf16.mxu0 %v218
    %258 = vmatpush1.bf16.msra.mxu0 %v217
    %259 = vmatprep.subr.bf16.mxu0 %v220
    %260 = vmatpush1.bf16.msra.mxu0 %v219
    %261 = vmatprep.subr.bf16.mxu0 %v222
    %262 = vmatpush1.bf16.msra.mxu0 %v221
    %263 = vmatprep.subr.bf16.mxu0 %v224
    %264 = vmatpush1.bf16.msra.mxu0 %v223
    %265 = vmatprep.subr.bf16.mxu0 %v226
    %266 = vmatpush1.bf16.msra.mxu0 %v225
    %267 = vmatprep.subr.bf16.mxu0 %v228
    %268 = vmatpush1.bf16.msra.mxu0 %v227
    %269 = vmatprep.mubr.bf16.mxu0 %v234
    %270 = vmatmul.mubr.bf16.gmra.mrb[0].mxu0 %v233
    %v271 = vpop.f32.mrb[0].mxu0
    %v272 = vadd.f32 0.0, %v271
    %v273 = vpop.f32.mrb[0].mxu0
    %v274 = vadd.f32 0.0, %v273
    %v275 = vpop.f32.mrb[0].mxu0
    %v276 = vpop.f32.mrb[0].mxu0
    %277 = vdwg.mxu0
    %v279 = vlaneseq
    %v280 = vshrl.u32 %v279, 7
    %v281 = vsub.s32 0, %v280
    %v282 = vrot.slane %v229, %v281
    %v283 = vlaneseq
    %v284 = vshrl.u32 %v283, 7
    %v285 = vsub.s32 2, %v284
    %v286 = vrot.slane %v229, %v285
    %v289 = vlaneseq
    %v290 = vshrl.u32 %v289, 7
    %v291 = vsub.s32 0, %v290
    %v292 = vrot.slane %v282, %v291
    %v293 = vlaneseq
    %v294 = vshrl.u32 %v293, 7
    %v295 = vsub.s32 0, %v294
    %v296 = vrot.slane %v286, %v295
    %v297 = vmul.f32 %v272, %v292
    %v298 = vmul.f32 %v274, %v296
    %v299 = vlaneseq
    %v300 = vshrl.u32 %v299, 7
    %v301 = vsub.s32 1, %v300
    %v302 = vrot.slane %v229, %v301
    %v303 = vlaneseq
    %v304 = vshrl.u32 %v303, 7
    %v305 = vsub.s32 3, %v304
    %v306 = vrot.slane %v229, %v305
    %v309 = vlaneseq
    %v310 = vshrl.u32 %v309, 7
    %v311 = vsub.s32 1, %v310
    %v312 = vrot.slane %v302, %v311
    %v313 = vlaneseq
    %v314 = vshrl.u32 %v313, 7
    %v315 = vsub.s32 1, %v314
    %v316 = vrot.slane %v306, %v315
    %v317 = vadd.f32 %v297, %v312
    %v318 = vadd.f32 %v298, %v316
    %v319 = vmax.f32 %v317, 0.0
    %v320 = vmax.f32 %v318, 0.0
    %v321 = vpack.c.bf16 %v319, %v319
    %v322 = vpack.c.bf16 %v320, %v320
    %v323 = vld [vmem:[#allocation8] sm:$0xff]
    %v324 = vld [vmem:[#allocation8 + $0x8] sm:$0xff]
    %v325 = vld [vmem:[#allocation8 + $0x10] sm:$0xff]
    %v326 = vld [vmem:[#allocation8 + $0x18] sm:$0xff]
    %v327 = vld [vmem:[#allocation8 + $0x20] sm:$0xff]
    %v328 = vld [vmem:[#allocation8 + $0x28] sm:$0xff]
    %v329 = vld [vmem:[#allocation8 + $0x30] sm:$0xff]
    %v330 = vld [vmem:[#allocation8 + $0x38] sm:$0xff]
    %v331 = vld [vmem:[#allocation8 + $0x40] sm:$0xff]
    %v332 = vld [vmem:[#allocation8 + $0x48] sm:$0xff]
    %v333 = vld [vmem:[#allocation8 + $0x50] sm:$0xff]
    %v334 = vld [vmem:[#allocation8 + $0x58] sm:$0xff]
    %v335 = vld [vmem:[#allocation8 + $0x60] sm:$0xff]
    %v336 = vld [vmem:[#allocation8 + $0x68] sm:$0xff]
    %v337 = vld [vmem:[#allocation8 + $0x70] sm:$0xff]
    %v338 = vld [vmem:[#allocation8 + $0x78] sm:$0xff]
    %v339 = vunpack.c.l.s8.bf16 %v323
    %v340 = vunpack.c.l.s8.bf16 %v324
    %v341 = vunpack.c.h.s8.bf16 %v323
    %v342 = vunpack.c.h.s8.bf16 %v324
    %v343 = vunpack.c.l.s8.bf16 %v325
    %v344 = vunpack.c.l.s8.bf16 %v326
    %v345 = vunpack.c.h.s8.bf16 %v325
    %v346 = vunpack.c.h.s8.bf16 %v326
    %v347 = vunpack.c.l.s8.bf16 %v327
    %v348 = vunpack.c.l.s8.bf16 %v328
    %v349 = vunpack.c.h.s8.bf16 %v327
    %v350 = vunpack.c.h.s8.bf16 %v328
    %v351 = vunpack.c.l.s8.bf16 %v329
    %v352 = vunpack.c.l.s8.bf16 %v330
    %v353 = vunpack.c.h.s8.bf16 %v329
    %v354 = vunpack.c.h.s8.bf16 %v330
    %v355 = vunpack.c.l.s8.bf16 %v331
    %v356 = vunpack.c.l.s8.bf16 %v332
    %v357 = vunpack.c.h.s8.bf16 %v331
    %v358 = vunpack.c.h.s8.bf16 %v332
    %v359 = vunpack.c.l.s8.bf16 %v333
    %v360 = vunpack.c.l.s8.bf16 %v334
    %v361 = vunpack.c.h.s8.bf16 %v333
    %v362 = vunpack.c.h.s8.bf16 %v334
    %v363 = vunpack.c.l.s8.bf16 %v335
    %v364 = vunpack.c.l.s8.bf16 %v336
    %v365 = vunpack.c.h.s8.bf16 %v335
    %v366 = vunpack.c.h.s8.bf16 %v336
    %v367 = vunpack.c.l.s8.bf16 %v337
    %v368 = vunpack.c.l.s8.bf16 %v338
    %v369 = vunpack.c.h.s8.bf16 %v337
    %v370 = vunpack.c.h.s8.bf16 %v338
    %v371 = vld [vmem:[#allocation10] sm:$0xf]
    %372 = vmatprep.subr.bf16.mxu0 %v340
    %373 = vmatpush1.bf16.msra.mxu0 %v339
    %374 = vmatprep.subr.bf16.mxu0 %v342
    %375 = vmatpush1.bf16.msra.mxu0 %v341
    %376 = vmatprep.subr.bf16.mxu0 %v344
    %377 = vmatpush1.bf16.msra.mxu0 %v343
    %378 = vmatprep.subr.bf16.mxu0 %v346
    %379 = vmatpush1.bf16.msra.mxu0 %v345
    %380 = vmatprep.subr.bf16.mxu0 %v348
    %381 = vmatpush1.bf16.msra.mxu0 %v347
    %382 = vmatprep.subr.bf16.mxu0 %v350
    %383 = vmatpush1.bf16.msra.mxu0 %v349
    %384 = vmatprep.subr.bf16.mxu0 %v352
    %385 = vmatpush1.bf16.msra.mxu0 %v351
    %386 = vmatprep.subr.bf16.mxu0 %v354
    %387 = vmatpush1.bf16.msra.mxu0 %v353
    %388 = vmatprep.subr.bf16.mxu0 %v356
    %389 = vmatpush1.bf16.msra.mxu0 %v355
    %390 = vmatprep.subr.bf16.mxu0 %v358
    %391 = vmatpush1.bf16.msra.mxu0 %v357
    %392 = vmatprep.subr.bf16.mxu0 %v360
    %393 = vmatpush1.bf16.msra.mxu0 %v359
    %394 = vmatprep.subr.bf16.mxu0 %v362
    %395 = vmatpush1.bf16.msra.mxu0 %v361
    %396 = vmatprep.subr.bf16.mxu0 %v364
    %397 = vmatpush1.bf16.msra.mxu0 %v363
    %398 = vmatprep.subr.bf16.mxu0 %v366
    %399 = vmatpush1.bf16.msra.mxu0 %v365
    %400 = vmatprep.subr.bf16.mxu0 %v368
    %401 = vmatpush1.bf16.msra.mxu0 %v367
    %402 = vmatprep.subr.bf16.mxu0 %v370
    %403 = vmatpush1.bf16.msra.mxu0 %v369
    %404 = vmatprep.mubr.bf16.mxu0 %v322
    %405 = vmatmul.mubr.bf16.gmra.mrb[0].mxu0 %v321
    %v406 = vpop.f32.mrb[0].mxu0
    %v407 = vadd.f32 0.0, %v406
    %v408 = vpop.f32.mrb[0].mxu0
    %v409 = vadd.f32 0.0, %v408
    %v410 = vpop.f32.mrb[0].mxu0
    %v411 = vpop.f32.mrb[0].mxu0
    %412 = vdwg.mxu0
    %v414 = vlaneseq
    %v415 = vshrl.u32 %v414, 7
    %v416 = vsub.s32 0, %v415
    %v417 = vrot.slane %v371, %v416
    %v418 = vlaneseq
    %v419 = vshrl.u32 %v418, 7
    %v420 = vsub.s32 2, %v419
    %v421 = vrot.slane %v371, %v420
    %v424 = vlaneseq
    %v425 = vshrl.u32 %v424, 7
    %v426 = vsub.s32 0, %v425
    %v427 = vrot.slane %v417, %v426
    %v428 = vlaneseq
    %v429 = vshrl.u32 %v428, 7
    %v430 = vsub.s32 0, %v429
    %v431 = vrot.slane %v421, %v430
    %v432 = vmul.f32 %v407, %v427
    %v433 = vmul.f32 %v409, %v431
    %v434 = vlaneseq
    %v435 = vshrl.u32 %v434, 7
    %v436 = vsub.s32 1, %v435
    %v437 = vrot.slane %v371, %v436
    %v438 = vlaneseq
    %v439 = vshrl.u32 %v438, 7
    %v440 = vsub.s32 3, %v439
    %v441 = vrot.slane %v371, %v440
    %v444 = vlaneseq
    %v445 = vshrl.u32 %v444, 7
    %v446 = vsub.s32 1, %v445
    %v447 = vrot.slane %v437, %v446
    %v448 = vlaneseq
    %v449 = vshrl.u32 %v448, 7
    %v450 = vsub.s32 1, %v449
    %v451 = vrot.slane %v441, %v450
    %v452 = vadd.f32 %v432, %v447
    %v453 = vadd.f32 %v433, %v451
    %v454 = vmax.f32 %v452, 0.0
    %v455 = vmax.f32 %v453, 0.0
    %v456 = vpack.c.bf16 %v454, %v454
    %v457 = vpack.c.bf16 %v455, %v455
    %v458 = vld [vmem:[#allocation11] sm:$0xff]
    %v459 = vld [vmem:[#allocation11 + $0x8] sm:$0xff]
    %v460 = vld [vmem:[#allocation11 + $0x10] sm:$0xff]
    %v461 = vld [vmem:[#allocation11 + $0x18] sm:$0xff]
    %v462 = vld [vmem:[#allocation11 + $0x20] sm:$0xff]
    %v463 = vld [vmem:[#allocation11 + $0x28] sm:$0xff]
    %v464 = vld [vmem:[#allocation11 + $0x30] sm:$0xff]
    %v465 = vld [vmem:[#allocation11 + $0x38] sm:$0xff]
    %v466 = vunpack.c.l.s8.bf16 %v458
    %v467 = vunpack.c.h.s8.bf16 %v458
    %v468 = vunpack.c.l.s8.bf16 %v459
    %v469 = vunpack.c.h.s8.bf16 %v459
    %v470 = vunpack.c.l.s8.bf16 %v460
    %v471 = vunpack.c.h.s8.bf16 %v460
    %v472 = vunpack.c.l.s8.bf16 %v461
    %v473 = vunpack.c.h.s8.bf16 %v461
    %v474 = vunpack.c.l.s8.bf16 %v462
    %v475 = vunpack.c.h.s8.bf16 %v462
    %v476 = vunpack.c.l.s8.bf16 %v463
    %v477 = vunpack.c.h.s8.bf16 %v463
    %v478 = vunpack.c.l.s8.bf16 %v464
    %v479 = vunpack.c.h.s8.bf16 %v464
    %v480 = vunpack.c.l.s8.bf16 %v465
    %v481 = vunpack.c.h.s8.bf16 %v465
    %v482 = vld [vmem:[%s6] sm:$0x3]
    %483 = vmatprep.subr.bf16.mxu0 0
    %484 = vmatpush1.bf16.msra.mxu0 %v466
    %485 = vmatprep.subr.bf16.mxu0 0
    %486 = vmatpush1.bf16.msra.mxu0 %v467
    %487 = vmatprep.subr.bf16.mxu0 0
    %488 = vmatpush1.bf16.msra.mxu0 %v468
    %489 = vmatprep.subr.bf16.mxu0 0
    %490 = vmatpush1.bf16.msra.mxu0 %v469
    %491 = vmatprep.subr.bf16.mxu0 0
    %492 = vmatpush1.bf16.msra.mxu0 %v470
    %493 = vmatprep.subr.bf16.mxu0 0
    %494 = vmatpush1.bf16.msra.mxu0 %v471
    %495 = vmatprep.subr.bf16.mxu0 0
    %496 = vmatpush1.bf16.msra.mxu0 %v472
    %497 = vmatprep.subr.bf16.mxu0 0
    %498 = vmatpush1.bf16.msra.mxu0 %v473
    %499 = vmatprep.subr.bf16.mxu0 0
    %500 = vmatpush1.bf16.msra.mxu0 %v474
    %501 = vmatprep.subr.bf16.mxu0 0
    %502 = vmatpush1.bf16.msra.mxu0 %v475
    %503 = vmatprep.subr.bf16.mxu0 0
    %504 = vmatpush1.bf16.msra.mxu0 %v476
    %505 = vmatprep.subr.bf16.mxu0 0
    %506 = vmatpush1.bf16.msra.mxu0 %v477
    %507 = vmatprep.subr.bf16.mxu0 0
    %508 = vmatpush1.bf16.msra.mxu0 %v478
    %509 = vmatprep.subr.bf16.mxu0 0
    %510 = vmatpush1.bf16.msra.mxu0 %v479
    %511 = vmatprep.subr.bf16.mxu0 0
    %512 = vmatpush1.bf16.msra.mxu0 %v480
    %513 = vmatprep.subr.bf16.mxu0 0
    %514 = vmatpush1.bf16.msra.mxu0 %v481
    %515 = vmatprep.mubr.bf16.mxu0 %v457
    %516 = vmatmul.mubr.bf16.gmra.mrb[0].mxu0 %v456
    %v517 = vpop.f32.mrb[0].mxu0
    %v518 = vadd.f32 0.0, %v517
    %v519 = vpop.f32.mrb[0].mxu0
    %v520 = vpop.f32.mrb[0].mxu0
    %v521 = vpop.f32.mrb[0].mxu0
    %522 = vdwg.mxu0
    %v523 = vlaneseq
    %v524 = vshrl.u32 %v523, 7
    %v525 = vsub.s32 0, %v524
    %v526 = vrot.slane %v482, %v525
    %v527 = vmul.f32 %v518, %v526
    %v528 = vlaneseq
    %v529 = vshrl.u32 %v528, 7
    %v530 = vsub.s32 1, %v529
    %v531 = vrot.slane %v482, %v530
    %v532 = vadd.f32 %v527, %v531
    %v533 = vmax.f32 %v532, 0.0
    %v534 = vpack.c.bf16 %v533, %v533
    %v535 = vld [vmem:[#allocation13] sm:$0xff]
    %v536 = vld [vmem:[#allocation13 + $0x8] sm:$0xff]
    %v537 = vld [vmem:[#allocation13 + $0x10] sm:$0xff]
    %v538 = vld [vmem:[#allocation13 + $0x18] sm:$0xff]
    %v539 = vunpack.c.l.s8.bf16 %v535
    %v540 = vunpack.c.h.s8.bf16 %v535
    %v541 = vunpack.c.l.s8.bf16 %v536
    %v542 = vunpack.c.h.s8.bf16 %v536
    %v543 = vunpack.c.l.s8.bf16 %v537
    %v544 = vunpack.c.h.s8.bf16 %v537
    %v545 = vunpack.c.l.s8.bf16 %v538
    %v546 = vunpack.c.h.s8.bf16 %v538
    %v547 = vld [vmem:[#allocation14] sm:$0x3]
    %548 = vmatprep.subr.bf16.mxu0 0
    %549 = vmatpush1.bf16.msra.mxu0 %v539
    %550 = vmatprep.subr.bf16.mxu0 0
    %551 = vmatpush1.bf16.msra.mxu0 %v540
    %552 = vmatprep.subr.bf16.mxu0 0
    %553 = vmatpush1.bf16.msra.mxu0 %v541
    %554 = vmatprep.subr.bf16.mxu0 0
    %555 = vmatpush1.bf16.msra.mxu0 %v542
    %556 = vmatprep.subr.bf16.mxu0 0
    %557 = vmatpush1.bf16.msra.mxu0 %v543
    %558 = vmatprep.subr.bf16.mxu0 0
    %559 = vmatpush1.bf16.msra.mxu0 %v544
    %560 = vmatprep.subr.bf16.mxu0 0
    %561 = vmatpush1.bf16.msra.mxu0 %v545
    %562 = vmatprep.subr.bf16.mxu0 0
    %563 = vmatpush1.bf16.msra.mxu0 %v546
    %564 = vmatprep.subr.bf16.mxu0 0
    %565 = vmatpush1.bf16.msra.mxu0 0
    %566 = vmatprep.subr.bf16.mxu0 0
    %567 = vmatpush1.bf16.msra.mxu0 0
    %568 = vmatprep.subr.bf16.mxu0 0
    %569 = vmatpush1.bf16.msra.mxu0 0
    %570 = vmatprep.subr.bf16.mxu0 0
    %571 = vmatpush1.bf16.msra.mxu0 0
    %572 = vmatprep.subr.bf16.mxu0 0
    %573 = vmatpush1.bf16.msra.mxu0 0
    %574 = vmatprep.subr.bf16.mxu0 0
    %575 = vmatpush1.bf16.msra.mxu0 0
    %576 = vmatprep.subr.bf16.mxu0 0
    %577 = vmatpush1.bf16.msra.mxu0 0
    %578 = vmatprep.subr.bf16.mxu0 0
    %579 = vmatpush1.bf16.msra.mxu0 0
    %580 = vmatprep.mubr.bf16.mxu0 0
    %581 = vmatmul.mubr.bf16.gmra.mrb[0].mxu0 %v534
    %v582 = vpop.f32.mrb[0].mxu0
    %v583 = vadd.f32 0.0, %v582
    %v584 = vpop.f32.mrb[0].mxu0
    %v585 = vpop.f32.mrb[0].mxu0
    %v586 = vpop.f32.mrb[0].mxu0
    %587 = vdwg.mxu0
    %v588 = vlaneseq
    %v589 = vshrl.u32 %v588, 7
    %v590 = vsub.s32 0, %v589
    %v591 = vrot.slane %v547, %v590
    %v592 = vmul.f32 %v583, %v591
    %v593 = vlaneseq
    %v594 = vshrl.u32 %v593, 7
    %v595 = vsub.s32 1, %v594
    %v596 = vrot.slane %v547, %v595
    %v597 = vadd.f32 %v592, %v596
    %v598 = vmax.f32 %v597, 0.0
    %v599 = vpack.c.bf16 %v598, %v598
    %v600 = vld [vmem:[%s9] sm:$0xff]
    %v601 = vld [vmem:[%s9 + $0x8] sm:$0xff]
    %v602 = vld [vmem:[%s9 + $0x10] sm:$0xff]
    %v603 = vld [vmem:[%s9 + $0x18] sm:$0xff]
    %v604 = vunpack.c.l.s8.bf16 %v600
    %v605 = vunpack.c.h.s8.bf16 %v600
    %v606 = vunpack.c.l.s8.bf16 %v601
    %v607 = vunpack.c.h.s8.bf16 %v601
    %v608 = vunpack.c.l.s8.bf16 %v602
    %v609 = vunpack.c.h.s8.bf16 %v602
    %v610 = vunpack.c.l.s8.bf16 %v603
    %v611 = vunpack.c.h.s8.bf16 %v603
    %v612 = vld [vmem:[%s10] sm:$0x3]
    %613 = vmatprep.subr.bf16.mxu0 0
    %614 = vmatpush1.bf16.msra.mxu0 %v604
    %615 = vmatprep.subr.bf16.mxu0 0
    %616 = vmatpush1.bf16.msra.mxu0 %v605
    %617 = vmatprep.subr.bf16.mxu0 0
    %618 = vmatpush1.bf16.msra.mxu0 %v606
    %619 = vmatprep.subr.bf16.mxu0 0
    %620 = vmatpush1.bf16.msra.mxu0 %v607
    %621 = vmatprep.subr.bf16.mxu0 0
    %622 = vmatpush1.bf16.msra.mxu0 %v608
    %623 = vmatprep.subr.bf16.mxu0 0
    %624 = vmatpush1.bf16.msra.mxu0 %v609
    %625 = vmatprep.subr.bf16.mxu0 0
    %626 = vmatpush1.bf16.msra.mxu0 %v610
    %627 = vmatprep.subr.bf16.mxu0 0
    %628 = vmatpush1.bf16.msra.mxu0 %v611
    %629 = vmatprep.subr.bf16.mxu0 0
    %630 = vmatpush1.bf16.msra.mxu0 0
    %631 = vmatprep.subr.bf16.mxu0 0
    %632 = vmatpush1.bf16.msra.mxu0 0
    %633 = vmatprep.subr.bf16.mxu0 0
    %634 = vmatpush1.bf16.msra.mxu0 0
    %635 = vmatprep.subr.bf16.mxu0 0
    %636 = vmatpush1.bf16.msra.mxu0 0
    %637 = vmatprep.subr.bf16.mxu0 0
    %638 = vmatpush1.bf16.msra.mxu0 0
    %639 = vmatprep.subr.bf16.mxu0 0
    %640 = vmatpush1.bf16.msra.mxu0 0
    %641 = vmatprep.subr.bf16.mxu0 0
    %642 = vmatpush1.bf16.msra.mxu0 0
    %643 = vmatprep.subr.bf16.mxu0 0
    %644 = vmatpush1.bf16.msra.mxu0 0
    %645 = vmatprep.mubr.bf16.mxu0 0
    %646 = vmatmul.mubr.bf16.gmra.mrb[0].mxu0 %v599
    %v647 = vpop.f32.mrb[0].mxu0
    %v648 = vadd.f32 0.0, %v647
    %v649 = vpop.f32.mrb[0].mxu0
    %v650 = vpop.f32.mrb[0].mxu0
    %v651 = vpop.f32.mrb[0].mxu0
    %652 = vdwg.mxu0
    %v653 = vlaneseq
    %v654 = vshrl.u32 %v653, 7
    %v655 = vsub.s32 0, %v654
    %v656 = vrot.slane %v612, %v655
    %v657 = vmul.f32 %v648, %v656
    %v658 = vlaneseq
    %v659 = vshrl.u32 %v658, 7
    %v660 = vsub.s32 1, %v659
    %v661 = vrot.slane %v612, %v660
    %v662 = vadd.f32 %v657, %v661
    %v663 = vmax.f32 %v662, 0.0
    %v664 = vpack.c.bf16 %v663, %v663
    %v665 = vld [vmem:[#allocation16] sm:$0xff]
    %v666 = vld [vmem:[#allocation16 + $0x8] sm:$0xff]
    %v667 = vld [vmem:[#allocation16 + $0x10] sm:$0xff]
    %v668 = vld [vmem:[#allocation16 + $0x18] sm:$0xff]
    %v669 = vunpack.c.l.s8.bf16 %v665
    %v670 = vunpack.c.h.s8.bf16 %v665
    %v671 = vunpack.c.l.s8.bf16 %v666
    %v672 = vunpack.c.h.s8.bf16 %v666
    %v673 = vunpack.c.l.s8.bf16 %v667
    %v674 = vunpack.c.h.s8.bf16 %v667
    %v675 = vunpack.c.l.s8.bf16 %v668
    %v676 = vunpack.c.h.s8.bf16 %v668
    %v677 = vld [vmem:[%s12] sm:$0x3]
    %678 = vmatprep.subr.bf16.mxu0 0
    %679 = vmatpush1.bf16.msra.mxu0 %v669
    %680 = vmatprep.subr.bf16.mxu0 0
    %681 = vmatpush1.bf16.msra.mxu0 %v670
    %682 = vmatprep.subr.bf16.mxu0 0
    %683 = vmatpush1.bf16.msra.mxu0 %v671
    %684 = vmatprep.subr.bf16.mxu0 0
    %685 = vmatpush1.bf16.msra.mxu0 %v672
    %686 = vmatprep.subr.bf16.mxu0 0
    %687 = vmatpush1.bf16.msra.mxu0 %v673
    %688 = vmatprep.subr.bf16.mxu0 0
    %689 = vmatpush1.bf16.msra.mxu0 %v674
    %690 = vmatprep.subr.bf16.mxu0 0
    %691 = vmatpush1.bf16.msra.mxu0 %v675
    %692 = vmatprep.subr.bf16.mxu0 0
    %693 = vmatpush1.bf16.msra.mxu0 %v676
    %694 = vmatprep.subr.bf16.mxu0 0
    %695 = vmatpush1.bf16.msra.mxu0 0
    %696 = vmatprep.subr.bf16.mxu0 0
    %697 = vmatpush1.bf16.msra.mxu0 0
    %698 = vmatprep.subr.bf16.mxu0 0
    %699 = vmatpush1.bf16.msra.mxu0 0
    %700 = vmatprep.subr.bf16.mxu0 0
    %701 = vmatpush1.bf16.msra.mxu0 0
    %702 = vmatprep.subr.bf16.mxu0 0
    %703 = vmatpush1.bf16.msra.mxu0 0
    %704 = vmatprep.subr.bf16.mxu0 0
    %705 = vmatpush1.bf16.msra.mxu0 0
    %706 = vmatprep.subr.bf16.mxu0 0
    %707 = vmatpush1.bf16.msra.mxu0 0
    %708 = vmatprep.subr.bf16.mxu0 0
    %709 = vmatpush1.bf16.msra.mxu0 0
    %710 = vmatprep.mubr.bf16.mxu0 0
    %711 = vmatmul.mubr.bf16.gmra.mrb[0].mxu0 %v664
    %v712 = vpop.f32.mrb[0].mxu0
    %v713 = vadd.f32 0.0, %v712
    %v714 = vpop.f32.mrb[0].mxu0
    %v715 = vpop.f32.mrb[0].mxu0
    %v716 = vpop.f32.mrb[0].mxu0
    %717 = vdwg.mxu0
    %v718 = vlaneseq
    %v719 = vshrl.u32 %v718, 7
    %v720 = vsub.s32 0, %v719
    %v721 = vrot.slane %v677, %v720
    %v722 = vmul.f32 %v713, %v721
    %v723 = vlaneseq
    %v724 = vshrl.u32 %v723, 7
    %v725 = vsub.s32 1, %v724
    %v726 = vrot.slane %v677, %v725
    %v727 = vadd.f32 %v722, %v726
    %v728 = vmax.f32 %v727, 0.0
    %v729 = vpack.c.bf16 %v728, %v728
    %v730 = vld [vmem:[#allocation17] sm:$0xff]
    %v731 = vld [vmem:[#allocation17 + $0x8] sm:$0xff]
    %v732 = vld [vmem:[#allocation17 + $0x10] sm:$0xff]
    %v733 = vld [vmem:[#allocation17 + $0x18] sm:$0xff]
    %v734 = vunpack.c.l.s8.bf16 %v730
    %v735 = vunpack.c.h.s8.bf16 %v730
    %v736 = vunpack.c.l.s8.bf16 %v731
    %v737 = vunpack.c.h.s8.bf16 %v731
    %v738 = vunpack.c.l.s8.bf16 %v732
    %v739 = vunpack.c.h.s8.bf16 %v732
    %v740 = vunpack.c.l.s8.bf16 %v733
    %v741 = vunpack.c.h.s8.bf16 %v733
    %v742 = vld [vmem:[%s14] sm:$0x3]
    %743 = vmatprep.subr.bf16.mxu0 0
    %744 = vmatpush1.bf16.msra.mxu0 %v734
    %745 = vmatprep.subr.bf16.mxu0 0
    %746 = vmatpush1.bf16.msra.mxu0 %v735
    %747 = vmatprep.subr.bf16.mxu0 0
    %748 = vmatpush1.bf16.msra.mxu0 %v736
    %749 = vmatprep.subr.bf16.mxu0 0
    %750 = vmatpush1.bf16.msra.mxu0 %v737
    %751 = vmatprep.subr.bf16.mxu0 0
    %752 = vmatpush1.bf16.msra.mxu0 %v738
    %753 = vmatprep.subr.bf16.mxu0 0
    %754 = vmatpush1.bf16.msra.mxu0 %v739
    %755 = vmatprep.subr.bf16.mxu0 0
    %756 = vmatpush1.bf16.msra.mxu0 %v740
    %757 = vmatprep.subr.bf16.mxu0 0
    %758 = vmatpush1.bf16.msra.mxu0 %v741
    %759 = vmatprep.subr.bf16.mxu0 0
    %760 = vmatpush1.bf16.msra.mxu0 0
    %761 = vmatprep.subr.bf16.mxu0 0
    %762 = vmatpush1.bf16.msra.mxu0 0
    %763 = vmatprep.subr.bf16.mxu0 0
    %764 = vmatpush1.bf16.msra.mxu0 0
    %765 = vmatprep.subr.bf16.mxu0 0
    %766 = vmatpush1.bf16.msra.mxu0 0
    %767 = vmatprep.subr.bf16.mxu0 0
    %768 = vmatpush1.bf16.msra.mxu0 0
    %769 = vmatprep.subr.bf16.mxu0 0
    %770 = vmatpush1.bf16.msra.mxu0 0
    %771 = vmatprep.subr.bf16.mxu0 0
    %772 = vmatpush1.bf16.msra.mxu0 0
    %773 = vmatprep.subr.bf16.mxu0 0
    %774 = vmatpush1.bf16.msra.mxu0 0
    %775 = vmatprep.mubr.bf16.mxu0 0
    %776 = vmatmul.mubr.bf16.gmra.mrb[0].mxu0 %v729
    %v777 = vpop.f32.mrb[0].mxu0
    %v778 = vadd.f32 0.0, %v777
    %v779 = vpop.f32.mrb[0].mxu0
    %v780 = vpop.f32.mrb[0].mxu0
    %v781 = vpop.f32.mrb[0].mxu0
    %782 = vdwg.mxu0
    %v783 = vlaneseq
    %v784 = vshrl.u32 %v783, 7
    %v785 = vsub.s32 0, %v784
    %v786 = vrot.slane %v742, %v785
    %v787 = vmul.f32 %v778, %v786
    %v788 = vlaneseq
    %v789 = vshrl.u32 %v788, 7
    %v790 = vsub.s32 1, %v789
    %v791 = vrot.slane %v742, %v790
    %v792 = vadd.f32 %v787, %v791
    %v793 = vpack.c.bf16 %v792, %v792
    %794 = vst [vmem:[#allocation19] sm:$0xf] %v793
    // Predicated region
    $region102: #{tpu_custom_call.1} parent=1 // pred_check
      _
    $region103: #{tpu_custom_call.1} parent=1 // pred_check_branch
      %796 = sbr.rel (0) target = $region105
    $region104: #{tpu_custom_call.1} parent=1 // pred_region
      %s798 = ssub.s32 64, 64
      %799 = vsyncadd [#allocation4], %s798
      %s801 = sshll.u32 [#allocation19], 4
      %s802 = int_to_ptr.vmem [resolvable:$true] %s801
      %804 = dma.vmem_to_hbm [thread:$0]  %s802, 64, %s15, [#allocation4]
    $region105: #{tpu_custom_call.1} parent=1 // pred_fallthru
      _
    // Predicated region
    $region106: #{tpu_custom_call.1} parent=1 // pred_check
      _
    $region107: #{tpu_custom_call.1} parent=1 // pred_check_branch
      %806 = sbr.rel (0) target = $region109
    $region108: #{tpu_custom_call.1} parent=1 // pred_region
      %807 = dma.done [#allocation4], 64
    $region109: #{tpu_custom_call.1} parent=1 // pred_fallthru
      _
    %808 = vsyncpa [#allocation3], 1
    %809 = vsyncpa [#allocation6], 1
    %810 = vsyncpa [#allocation9], 1
    %811 = vsyncpa [#allocation12], 1
    %812 = vsyncpa [#allocation15], 1
    %813 = vsyncpa [#allocation18], 1
    %814 = vsyncpa [#allocation4], 1

// kernel: tpu_custom_call.1
$region0: #{tpu_custom_call.1}
  #allocation0 [shape = 'u32[]', space=smem, size = 0x4, offset = 0x4, fixed_abs, tag = 'smem constant byte address 0x4 - core index']
  #allocation1 [shape = 'u32[144,128]{1,0:T(1,128)}', space=vmem, size = 0x12000, scoped, tag = 'internal scratch']
  %s0 = inlined_call_operand.hbm [shape: bf16[8,256], index: 0, kind: input, shape index: {}]
  %s1 = inlined_call_operand.hbm [shape: s8[256,256], index: 1, kind: input, shape index: {}]
  %s2 = inlined_call_operand.hbm [shape: f32[2,256], index: 2, kind: input, shape index: {}]
  %s3 = inlined_call_operand.hbm [shape: s8[256,256], index: 3, kind: input, shape index: {}]
  %s4 = inlined_call_operand.hbm [shape: f32[2,256], index: 4, kind: input, shape index: {}]
  %s5 = inlined_call_operand.hbm [shape: s8[256,128], index: 5, kind: input, shape index: {}]
  %s6 = inlined_call_operand.vmem [shape: f32[2,128], index: 6, kind: input, shape index: {}]
  %s7 = inlined_call_operand.hbm [shape: s8[128,128], index: 7, kind: input, shape index: {}]
  %s8 = inlined_call_operand.hbm [shape: f32[2,128], index: 8, kind: input, shape index: {}]
  %s9 = inlined_call_operand.vmem [shape: s8[128,128], index: 9, kind: input, shape index: {}]
  %s10 = inlined_call_operand.vmem [shape: f32[2,128], index: 10, kind: input, shape index: {}]
  %s11 = inlined_call_operand.hbm [shape: s8[128,128], index: 11, kind: input, shape index: {}]
  %s12 = inlined_call_operand.vmem [shape: f32[2,128], index: 12, kind: input, shape index: {}]
  %s13 = inlined_call_operand.hbm [shape: s8[128,128], index: 13, kind: input, shape index: {}]
  %s14 = inlined_call_operand.vmem [shape: f32[2,128], index: 14, kind: input, shape index: {}]
  %s15 = inlined_call_operand.hbm [shape: bf16[8,128], index: 15, kind: output, shape index: {}]
  %s16 = sld [smem:[#allocation0]]
  $region110: #{tpu_custom_call.1} parent=0
    _
  %s18 = ssub.s32 1, %s16
  %s19 = scalar_select 0, %s18, %s16
  $region1: #{tpu_custom_call.1} parent=0
    #allocation2 [shape = 'u8[4096]{0}', space=vmem, size = 0x1000, scoped, tag = 'input window, operand 0, single buffered']
    #allocation3 [shape = 's32[1]{0}', space=sflag, size = 0x4, scoped, tag = 'scoped memory for tpu_custom_call.1']
    #allocation4 [shape = 's32[1]{0}', space=sflag, size = 0x4, scoped, tag = 'scoped memory for tpu_custom_call.1']
    #allocation5 [shape = 'u8[65536]{0}', space=vmem, size = 0x10000, scoped, tag = 'input window, operand 1, single buffered']
    #allocation6 [shape = 's32[1]{0}', space=sflag, size = 0x4, scoped, tag = 'scoped memory for tpu_custom_call.1']
    #allocation7 [shape = 'u8[2048]{0}', space=vmem, size = 0x800, scoped, tag = 'input window, operand 2, single buffered']
    #allocation8 [shape = 'u8[65536]{0}', space=vmem, size = 0x10000, scoped, tag = 'input window, operand 3, single buffered']
    #allocation9 [shape = 's32[1]{0}', space=sflag, size = 0x4, scoped, tag = 'scoped memory for tpu_custom_call.1']
    #allocation10 [shape = 'u8[2048]{0}', space=vmem, size = 0x800, scoped, tag = 'input window, operand 4, single buffered']
    #allocation11 [shape = 'u8[32768]{0}', space=vmem, size = 0x8000, scoped, tag = 'input window, operand 5, single buffered']
    #allocation12 [shape = 's32[1]{0}', space=sflag, size = 0x4, scoped, tag = 'scoped memory for tpu_custom_call.1']
    #allocation13 [shape = 'u8[16384]{0}', space=vmem, size = 0x4000, scoped, tag = 'input window, operand 7, single buffered']
    #allocation14 [shape = 'u8[1024]{0}', space=vmem, size = 0x400, scoped, tag = 'input window, operand 8, single buffered']
    #allocation15 [shape = 's32[1]{0}', space=sflag, size = 0x4, scoped, tag = 'scoped memory for tpu_custom_call.1']
    #allocation16 [shape = 'u8[16384]{0}', space=vmem, size = 0x4000, scoped, tag = 'input window, operand 11, single buffered']
    #allocation17 [shape = 'u8[16384]{0}', space=vmem, size = 0x4000, scoped, tag = 'input window, operand 13, single buffered']
    #allocation18 [shape = 's32[1]{0}', space=sflag, size = 0x4, scoped, tag = 'scoped memory for tpu_custom_call.1']
    #allocation19 [shape = 'u8[2048]{0}', space=vmem, size = 0x800, scoped, tag = 'output window, operand 0, single buffered']
    %20 = vsyncpa [#allocation3], 0
    %21 = vsyncpa [#allocation6], 0
    %22 = vsyncpa [#allocation9], 0
    %23 = vsyncpa [#allocation12], 0
    %24 = vsyncpa [#allocation15], 0
    %25 = vsyncpa [#allocation18], 0
    %26 = vsyncpa [#allocation4], 0
    // Predicated region
    $region2: #{tpu_custom_call.1} parent=1 // pred_check
      _
    $region3: #{tpu_custom_call.1} parent=1 // pred_check_branch
      %28 = sbr.rel (0) target = $region5
    $region4: #{tpu_custom_call.1} parent=1 // pred_region
      %s30 = ssub.s32 128, 128
      %31 = vsyncadd [#allocation3], %s30
      %s33 = sshll.u32 [#allocation2], 4
      %s34 = int_to_ptr.vmem [resolvable:$true] %s33
      %36 = dma.hbm_to_vmem [thread:$0]  %s0, 128, %s34, [#allocation3]
    $region5: #{tpu_custom_call.1} parent=1 // pred_fallthru
      _
    // Predicated region
    $region6: #{tpu_custom_call.1} parent=1 // pred_check
      _
    $region7: #{tpu_custom_call.1} parent=1 // pred_check_branch
      %38 = sbr.rel (0) target = $region9
    $region8: #{tpu_custom_call.1} parent=1 // pred_region
      %s40 = ssub.s32 2048, 2048
      %41 = vsyncadd [#allocation6], %s40
      %s42 = sshll.u32 [#allocation5], 4
      %s43 = int_to_ptr.vmem [resolvable:$true] %s42
      %48 = dma.hbm_to_vmem [thread:$0]  %s1, 2048, %s43, [#allocation6], 256, 256, 16
    $region9: #{tpu_custom_call.1} parent=1 // pred_fallthru
      _
    // Predicated region
    $region10: #{tpu_custom_call.1} parent=1 // pred_check
      _
    $region11: #{tpu_custom_call.1} parent=1 // pred_check_branch
      %50 = sbr.rel (0) target = $region13
    $region12: #{tpu_custom_call.1} parent=1 // pred_region
      %s52 = ssub.s32 64, 64
      %53 = vsyncadd [#allocation6], %s52
      %s55 = sshll.u32 [#allocation7], 4
      %s56 = int_to_ptr.vmem [resolvable:$true] %s55
      %58 = dma.hbm_to_vmem [thread:$0]  %s2, 64, %s56, [#allocation6]
    $region13: #{tpu_custom_call.1} parent=1 // pred_fallthru
      _
    // Predicated region
    $region14: #{tpu_custom_call.1} parent=1 // pred_check
      _
    $region15: #{tpu_custom_call.1} parent=1 // pred_check_branch
      %60 = sbr.rel (0) target = $region17
    $region16: #{tpu_custom_call.1} parent=1 // pred_region
      %s62 = ssub.s32 2048, 2048
      %63 = vsyncadd [#allocation9], %s62
      %s64 = sshll.u32 [#allocation8], 4
      %s65 = int_to_ptr.vmem [resolvable:$true] %s64
      %70 = dma.hbm_to_vmem [thread:$0]  %s3, 2048, %s65, [#allocation9], 256, 256, 16
    $region17: #{tpu_custom_call.1} parent=1 // pred_fallthru
      _
    // Predicated region
    $region18: #{tpu_custom_call.1} parent=1 // pred_check
      _
    $region19: #{tpu_custom_call.1} parent=1 // pred_check_branch
      %72 = sbr.rel (0) target = $region21
    $region20: #{tpu_custom_call.1} parent=1 // pred_region
      %s74 = ssub.s32 64, 64
      %75 = vsyncadd [#allocation9], %s74
      %s77 = sshll.u32 [#allocation10], 4
      %s78 = int_to_ptr.vmem [resolvable:$true] %s77
      %80 = dma.hbm_to_vmem [thread:$0]  %s4, 64, %s78, [#allocation9]
    $region21: #{tpu_custom_call.1} parent=1 // pred_fallthru
      _
    // Predicated region
    $region22: #{tpu_custom_call.1} parent=1 // pred_check
      _
    $region23: #{tpu_custom_call.1} parent=1 // pred_check_branch
      %82 = sbr.rel (0) target = $region25
    $region24: #{tpu_custom_call.1} parent=1 // pred_region
      %s84 = ssub.s32 1024, 1024
      %85 = vsyncadd [#allocation12], %s84
      %s86 = sshll.u32 [#allocation11], 4
      %s87 = int_to_ptr.vmem [resolvable:$true] %s86
      %92 = dma.hbm_to_vmem [thread:$0]  %s5, 1024, %s87, [#allocation12], 128, 128, 8
    $region25: #{tpu_custom_call.1} parent=1 // pred_fallthru
      _
    // Predicated region
    $region26: #{tpu_custom_call.1} parent=1 // pred_check
      _
    $region27: #{tpu_custom_call.1} parent=1 // pred_check_branch
      %94 = sbr.rel (0) target = $region29
    $region28: #{tpu_custom_call.1} parent=1 // pred_region
      _
    $region29: #{tpu_custom_call.1} parent=1 // pred_fallthru
      _
    // Predicated region
    $region30: #{tpu_custom_call.1} parent=1 // pred_check
      _
    $region31: #{tpu_custom_call.1} parent=1 // pred_check_branch
      %96 = sbr.rel (0) target = $region33
    $region32: #{tpu_custom_call.1} parent=1 // pred_region
      %s98 = ssub.s32 512, 512
      %99 = vsyncadd [#allocation12], %s98
      %s100 = sshll.u32 [#allocation13], 4
      %s101 = int_to_ptr.vmem [resolvable:$true] %s100
      %106 = dma.hbm_to_vmem [thread:$0]  %s7, 512, %s101, [#allocation12], 128, 128, 8
    $region33: #{tpu_custom_call.1} parent=1 // pred_fallthru
      _
    // Predicated region
    $region34: #{tpu_custom_call.1} parent=1 // pred_check
      _
    $region35: #{tpu_custom_call.1} parent=1 // pred_check_branch
      %108 = sbr.rel (0) target = $region37
    $region36: #{tpu_custom_call.1} parent=1 // pred_region
      %s110 = ssub.s32 32, 32
      %111 = vsyncadd [#allocation15], %s110
      %s113 = sshll.u32 [#allocation14], 4
      %s114 = int_to_ptr.vmem [resolvable:$true] %s113
      %116 = dma.hbm_to_vmem [thread:$0]  %s8, 32, %s114, [#allocation15]
    $region37: #{tpu_custom_call.1} parent=1 // pred_fallthru
      _
    // Predicated region
    $region38: #{tpu_custom_call.1} parent=1 // pred_check
      _
    $region39: #{tpu_custom_call.1} parent=1 // pred_check_branch
      %118 = sbr.rel (0) target = $region41
    $region40: #{tpu_custom_call.1} parent=1 // pred_region
      _
    $region41: #{tpu_custom_call.1} parent=1 // pred_fallthru
      _
    // Predicated region
    $region42: #{tpu_custom_call.1} parent=1 // pred_check
      _
    $region43: #{tpu_custom_call.1} parent=1 // pred_check_branch
      %120 = sbr.rel (0) target = $region45
    $region44: #{tpu_custom_call.1} parent=1 // pred_region
      _
    $region45: #{tpu_custom_call.1} parent=1 // pred_fallthru
      _
    // Predicated region
    $region46: #{tpu_custom_call.1} parent=1 // pred_check
      _
    $region47: #{tpu_custom_call.1} parent=1 // pred_check_branch
      %122 = sbr.rel (0) target = $region49
    $region48: #{tpu_custom_call.1} parent=1 // pred_region
      %s124 = ssub.s32 512, 512
      %125 = vsyncadd [#allocation15], %s124
      %s126 = sshll.u32 [#allocation16], 4
      %s127 = int_to_ptr.vmem [resolvable:$true] %s126
      %132 = dma.hbm_to_vmem [thread:$0]  %s11, 512, %s127, [#allocation15], 128, 128, 8
    $region49: #{tpu_custom_call.1} parent=1 // pred_fallthru
      _
    // Predicated region
    $region50: #{tpu_custom_call.1} parent=1 // pred_check
      _
    $region51: #{tpu_custom_call.1} parent=1 // pred_check_branch
      %134 = sbr.rel (0) target = $region53
    $region52: #{tpu_custom_call.1} parent=1 // pred_region
      _
    $region53: #{tpu_custom_call.1} parent=1 // pred_fallthru
      _
    // Predicated region
    $region54: #{tpu_custom_call.1} parent=1 // pred_check
      _
    $region55: #{tpu_custom_call.1} parent=1 // pred_check_branch
      %136 = sbr.rel (0) target = $region57
    $region56: #{tpu_custom_call.1} parent=1 // pred_region
      %s138 = ssub.s32 512, 512
      %139 = vsyncadd [#allocation18], %s138
      %s140 = sshll.u32 [#allocation17], 4
      %s141 = int_to_ptr.vmem [resolvable:$true] %s140
      %146 = dma.hbm_to_vmem [thread:$0]  %s13, 512, %s141, [#allocation18], 128, 128, 8
    $region57: #{tpu_custom_call.1} parent=1 // pred_fallthru
      _
    // Predicated region
    $region58: #{tpu_custom_call.1} parent=1 // pred_check
      _
    $region59: #{tpu_custom_call.1} parent=1 // pred_check_branch
      %148 = sbr.rel (0) target = $region61
    $region60: #{tpu_custom_call.1} parent=1 // pred_region
      _
    $region61: #{tpu_custom_call.1} parent=1 // pred_fallthru
      _
    // Predicated region
    $region62: #{tpu_custom_call.1} parent=1 // pred_check
      _
    $region63: #{tpu_custom_call.1} parent=1 // pred_check_branch
      %150 = sbr.rel (0) target = $region65
    $region64: #{tpu_custom_call.1} parent=1 // pred_region
      %151 = dma.done [#allocation3], 128
    $region65: #{tpu_custom_call.1} parent=1 // pred_fallthru
      _
    // Predicated region
    $region66: #{tpu_custom_call.1} parent=1 // pred_check
      _
    $region67: #{tpu_custom_call.1} parent=1 // pred_check_branch
      %153 = sbr.rel (0) target = $region69
    $region68: #{tpu_custom_call.1} parent=1 // pred_region
      %154 = dma.done [#allocation6], 2048
    $region69: #{tpu_custom_call.1} parent=1 // pred_fallthru
      _
    // Predicated region
    $region70: #{tpu_custom_call.1} parent=1 // pred_check
      _
    $region71: #{tpu_custom_call.1} parent=1 // pred_check_branch
      %156 = sbr.rel (0) target = $region73
    $region72: #{tpu_custom_call.1} parent=1 // pred_region
      %157 = dma.done [#allocation6], 64
    $region73: #{tpu_custom_call.1} parent=1 // pred_fallthru
      _
    // Predicated region
    $region74: #{tpu_custom_call.1} parent=1 // pred_check
      _
    $region75: #{tpu_custom_call.1} parent=1 // pred_check_branch
      %159 = sbr.rel (0) target = $region77
    $region76: #{tpu_custom_call.1} parent=1 // pred_region
      %160 = dma.done [#allocation9], 2048
    $region77: #{tpu_custom_call.1} parent=1 // pred_fallthru
      _
    // Predicated region
    $region78: #{tpu_custom_call.1} parent=1 // pred_check
      _
    $region79: #{tpu_custom_call.1} parent=1 // pred_check_branch
      %162 = sbr.rel (0) target = $region81
    $region80: #{tpu_custom_call.1} parent=1 // pred_region
      %163 = dma.done [#allocation9], 64
    $region81: #{tpu_custom_call.1} parent=1 // pred_fallthru
      _
    // Predicated region
    $region82: #{tpu_custom_call.1} parent=1 // pred_check
      _
    $region83: #{tpu_custom_call.1} parent=1 // pred_check_branch
      %165 = sbr.rel (0) target = $region85
    $region84: #{tpu_custom_call.1} parent=1 // pred_region
      %166 = dma.done [#allocation12], 1024
    $region85: #{tpu_custom_call.1} parent=1 // pred_fallthru
      _
    // Predicated region
    $region86: #{tpu_custom_call.1} parent=1 // pred_check
      _
    $region87: #{tpu_custom_call.1} parent=1 // pred_check_branch
      %168 = sbr.rel (0) target = $region89
    $region88: #{tpu_custom_call.1} parent=1 // pred_region
      %169 = dma.done [#allocation12], 512
    $region89: #{tpu_custom_call.1} parent=1 // pred_fallthru
      _
    // Predicated region
    $region90: #{tpu_custom_call.1} parent=1 // pred_check
      _
    $region91: #{tpu_custom_call.1} parent=1 // pred_check_branch
      %171 = sbr.rel (0) target = $region93
    $region92: #{tpu_custom_call.1} parent=1 // pred_region
      %172 = dma.done [#allocation15], 32
    $region93: #{tpu_custom_call.1} parent=1 // pred_fallthru
      _
    // Predicated region
    $region94: #{tpu_custom_call.1} parent=1 // pred_check
      _
    $region95: #{tpu_custom_call.1} parent=1 // pred_check_branch
      %174 = sbr.rel (0) target = $region97
    $region96: #{tpu_custom_call.1} parent=1 // pred_region
      %175 = dma.done [#allocation15], 512
    $region97: #{tpu_custom_call.1} parent=1 // pred_fallthru
      _
    // Predicated region
    $region98: #{tpu_custom_call.1} parent=1 // pred_check
      _
    $region99: #{tpu_custom_call.1} parent=1 // pred_check_branch
      %177 = sbr.rel (0) target = $region101
    $region100: #{tpu_custom_call.1} parent=1 // pred_region
      %178 = dma.done [#allocation18], 512
    $region101: #{tpu_custom_call.1} parent=1 // pred_fallthru
      _
    %v180 = vld [vmem:[#allocation2] sm:$0xff]
    %v181 = vld [vmem:[#allocation5] sm:$0xff]
    %v182 = vld [vmem:[#allocation5 + $0x8] sm:$0xff]
    %v183 = vld [vmem:[#allocation5 + $0x10] sm:$0xff]
    %v184 = vld [vmem:[#allocation5 + $0x18] sm:$0xff]
    %v185 = vld [vmem:[#allocation5 + $0x20] sm:$0xff]
    %v186 = vld [vmem:[#allocation5 + $0x28] sm:$0xff]
    %v187 = vld [vmem:[#allocation5 + $0x30] sm:$0xff]
    %v188 = vld [vmem:[#allocation5 + $0x38] sm:$0xff]
    %v189 = vld [vmem:[#allocation5 + $0x40] sm:$0xff]
    %v190 = vld [vmem:[#allocation5 + $0x48] sm:$0xff]
    %v191 = vld [vmem:[#allocation5 + $0x50] sm:$0xff]
    %v192 = vld [vmem:[#allocation5 + $0x58] sm:$0xff]
    %v193 = vld [vmem:[#allocation5 + $0x60] sm:$0xff]
    %v194 = vld [vmem:[#allocation5 + $0x68] sm:$0xff]
    %v195 = vld [vmem:[#allocation5 + $0x70] sm:$0xff]
    %v196 = vld [vmem:[#allocation5 + $0x78] sm:$0xff]
    %v197 = vunpack.c.l.s8.bf16 %v181
    %v198 = vunpack.c.l.s8.bf16 %v182
    %v199 = vunpack.c.h.s8.bf16 %v181
    %v200 = vunpack.c.h.s8.bf16 %v182
    %v201 = vunpack.c.l.s8.bf16 %v183
    %v202 = vunpack.c.l.s8.bf16 %v184
    %v203 = vunpack.c.h.s8.bf16 %v183
    %v204 = vunpack.c.h.s8.bf16 %v184
    %v205 = vunpack.c.l.s8.bf16 %v185
    %v206 = vunpack.c.l.s8.bf16 %v186
    %v207 = vunpack.c.h.s8.bf16 %v185
    %v208 = vunpack.c.h.s8.bf16 %v186
    %v209 = vunpack.c.l.s8.bf16 %v187
    %v210 = vunpack.c.l.s8.bf16 %v188
    %v211 = vunpack.c.h.s8.bf16 %v187
    %v212 = vunpack.c.h.s8.bf16 %v188
    %v213 = vunpack.c.l.s8.bf16 %v189
    %v214 = vunpack.c.l.s8.bf16 %v190
    %v215 = vunpack.c.h.s8.bf16 %v189
    %v216 = vunpack.c.h.s8.bf16 %v190
    %v217 = vunpack.c.l.s8.bf16 %v191
    %v218 = vunpack.c.l.s8.bf16 %v192
    %v219 = vunpack.c.h.s8.bf16 %v191
    %v220 = vunpack.c.h.s8.bf16 %v192
    %v221 = vunpack.c.l.s8.bf16 %v193
    %v222 = vunpack.c.l.s8.bf16 %v194
    %v223 = vunpack.c.h.s8.bf16 %v193
    %v224 = vunpack.c.h.s8.bf16 %v194
    %v225 = vunpack.c.l.s8.bf16 %v195
    %v226 = vunpack.c.l.s8.bf16 %v196
    %v227 = vunpack.c.h.s8.bf16 %v195
    %v228 = vunpack.c.h.s8.bf16 %v196
    %v229 = vld [vmem:[#allocation7] sm:$0xf]
    %v231 = vunpack.c.l.b16 %v180
    %v232 = vunpack.c.h.b16 %v180
    %v233 = vpack.c.b16 %v231, %v231
    %v234 = vpack.c.b16 %v232, %v232
    %237 = vmatprep.subr.bf16.mxu0 %v198
    %238 = vmatpush1.bf16.msra.mxu0 %v197
    %239 = vmatprep.subr.bf16.mxu0 %v200
    %240 = vmatpush1.bf16.msra.mxu0 %v199
    %241 = vmatprep.subr.bf16.mxu0 %v202
    %242 = vmatpush1.bf16.msra.mxu0 %v201
    %243 = vmatprep.subr.bf16.mxu0 %v204
    %244 = vmatpush1.bf16.msra.mxu0 %v203
    %245 = vmatprep.subr.bf16.mxu0 %v206
    %246 = vmatpush1.bf16.msra.mxu0 %v205
    %247 = vmatprep.subr.bf16.mxu0 %v208
    %248 = vmatpush1.bf16.msra.mxu0 %v207
    %249 = vmatprep.subr.bf16.mxu0 %v210
    %250 = vmatpush1.bf16.msra.mxu0 %v209
    %251 = vmatprep.subr.bf16.mxu0 %v212
    %252 = vmatpush1.bf16.msra.mxu0 %v211
    %253 = vmatprep.subr.bf16.mxu0 %v214
    %254 = vmatpush1.bf16.msra.mxu0 %v213
    %255 = vmatprep.subr.bf16.mxu0 %v216
    %256 = vmatpush1.bf16.msra.mxu0 %v215
    %257 = vmatprep.subr.bf16.mxu0 %v218
    %258 = vmatpush1.bf16.msra.mxu0 %v217
    %259 = vmatprep.subr.bf16.mxu0 %v220
    %260 = vmatpush1.bf16.msra.mxu0 %v219
    %261 = vmatprep.subr.bf16.mxu0 %v222
    %262 = vmatpush1.bf16.msra.mxu0 %v221
    %263 = vmatprep.subr.bf16.mxu0 %v224
    %264 = vmatpush1.bf16.msra.mxu0 %v223
    %265 = vmatprep.subr.bf16.mxu0 %v226
    %266 = vmatpush1.bf16.msra.mxu0 %v225
    %267 = vmatprep.subr.bf16.mxu0 %v228
    %268 = vmatpush1.bf16.msra.mxu0 %v227
    %269 = vmatprep.mubr.bf16.mxu0 %v234
    %270 = vmatmul.mubr.bf16.gmra.mrb[0].mxu0 %v233
    %v271 = vpop.f32.mrb[0].mxu0
    %v272 = vadd.f32 0.0, %v271
    %v273 = vpop.f32.mrb[0].mxu0
    %v274 = vadd.f32 0.0, %v273
    %v275 = vpop.f32.mrb[0].mxu0
    %v276 = vpop.f32.mrb[0].mxu0
    %277 = vdwg.mxu0
    %v279 = vlaneseq
    %v280 = vshrl.u32 %v279, 7
    %v281 = vsub.s32 0, %v280
    %v282 = vrot.slane %v229, %v281
    %v283 = vlaneseq
    %v284 = vshrl.u32 %v283, 7
    %v285 = vsub.s32 2, %v284
    %v286 = vrot.slane %v229, %v285
    %v289 = vlaneseq
    %v290 = vshrl.u32 %v289, 7
    %v291 = vsub.s32 0, %v290
    %v292 = vrot.slane %v282, %v291
    %v293 = vlaneseq
    %v294 = vshrl.u32 %v293, 7
    %v295 = vsub.s32 0, %v294
    %v296 = vrot.slane %v286, %v295
    %v297 = vmul.f32 %v272, %v292
    %v298 = vmul.f32 %v274, %v296
    %v299 = vlaneseq
    %v300 = vshrl.u32 %v299, 7
    %v301 = vsub.s32 1, %v300
    %v302 = vrot.slane %v229, %v301
    %v303 = vlaneseq
    %v304 = vshrl.u32 %v303, 7
    %v305 = vsub.s32 3, %v304
    %v306 = vrot.slane %v229, %v305
    %v309 = vlaneseq
    %v310 = vshrl.u32 %v309, 7
    %v311 = vsub.s32 1, %v310
    %v312 = vrot.slane %v302, %v311
    %v313 = vlaneseq
    %v314 = vshrl.u32 %v313, 7
    %v315 = vsub.s32 1, %v314
    %v316 = vrot.slane %v306, %v315
    %v317 = vadd.f32 %v297, %v312
    %v318 = vadd.f32 %v298, %v316
    %v319 = vmax.f32 %v317, 0.0
    %v320 = vmax.f32 %v318, 0.0
    %v321 = vpack.c.bf16 %v319, %v319
    %v322 = vpack.c.bf16 %v320, %v320
    %v323 = vld [vmem:[#allocation8] sm:$0xff]
    %v324 = vld [vmem:[#allocation8 + $0x8] sm:$0xff]
    %v325 = vld [vmem:[#allocation8 + $0x10] sm:$0xff]
    %v326 = vld [vmem:[#allocation8 + $0x18] sm:$0xff]
    %v327 = vld [vmem:[#allocation8 + $0x20] sm:$0xff]
    %v328 = vld [vmem:[#allocation8 + $0x28] sm:$0xff]
    %v329 = vld [vmem:[#allocation8 + $0x30] sm:$0xff]
    %v330 = vld [vmem:[#allocation8 + $0x38] sm:$0xff]
    %v331 = vld [vmem:[#allocation8 + $0x40] sm:$0xff]
    %v332 = vld [vmem:[#allocation8 + $0x48] sm:$0xff]
    %v333 = vld [vmem:[#allocation8 + $0x50] sm:$0xff]
    %v334 = vld [vmem:[#allocation8 + $0x58] sm:$0xff]
    %v335 = vld [vmem:[#allocation8 + $0x60] sm:$0xff]
    %v336 = vld [vmem:[#allocation8 + $0x68] sm:$0xff]
    %v337 = vld [vmem:[#allocation8 + $0x70] sm:$0xff]
    %v338 = vld [vmem:[#allocation8 + $0x78] sm:$0xff]
    %v339 = vunpack.c.l.s8.bf16 %v323
    %v340 = vunpack.c.l.s8.bf16 %v324
    %v341 = vunpack.c.h.s8.bf16 %v323
    %v342 = vunpack.c.h.s8.bf16 %v324
    %v343 = vunpack.c.l.s8.bf16 %v325
    %v344 = vunpack.c.l.s8.bf16 %v326
    %v345 = vunpack.c.h.s8.bf16 %v325
    %v346 = vunpack.c.h.s8.bf16 %v326
    %v347 = vunpack.c.l.s8.bf16 %v327
    %v348 = vunpack.c.l.s8.bf16 %v328
    %v349 = vunpack.c.h.s8.bf16 %v327
    %v350 = vunpack.c.h.s8.bf16 %v328
    %v351 = vunpack.c.l.s8.bf16 %v329
    %v352 = vunpack.c.l.s8.bf16 %v330
    %v353 = vunpack.c.h.s8.bf16 %v329
    %v354 = vunpack.c.h.s8.bf16 %v330
    %v355 = vunpack.c.l.s8.bf16 %v331
    %v356 = vunpack.c.l.s8.bf16 %v332
    %v357 = vunpack.c.h.s8.bf16 %v331
    %v358 = vunpack.c.h.s8.bf16 %v332
    %v359 = vunpack.c.l.s8.bf16 %v333
    %v360 = vunpack.c.l.s8.bf16 %v334
    %v361 = vunpack.c.h.s8.bf16 %v333
    %v362 = vunpack.c.h.s8.bf16 %v334
    %v363 = vunpack.c.l.s8.bf16 %v335
    %v364 = vunpack.c.l.s8.bf16 %v336
    %v365 = vunpack.c.h.s8.bf16 %v335
    %v366 = vunpack.c.h.s8.bf16 %v336
    %v367 = vunpack.c.l.s8.bf16 %v337
    %v368 = vunpack.c.l.s8.bf16 %v338
    %v369 = vunpack.c.h.s8.bf16 %v337
    %v370 = vunpack.c.h.s8.bf16 %v338
    %v371 = vld [vmem:[#allocation10] sm:$0xf]
    %372 = vmatprep.subr.bf16.mxu0 %v340
    %373 = vmatpush1.bf16.msra.mxu0 %v339
    %374 = vmatprep.subr.bf16.mxu0 %v342
    %375 = vmatpush1.bf16.msra.mxu0 %v341
    %376 = vmatprep.subr.bf16.mxu0 %v344
    %377 = vmatpush1.bf16.msra.mxu0 %v343
    %378 = vmatprep.subr.bf16.mxu0 %v346
    %379 = vmatpush1.bf16.msra.mxu0 %v345
    %380 = vmatprep.subr.bf16.mxu0 %v348
    %381 = vmatpush1.bf16.msra.mxu0 %v347
    %382 = vmatprep.subr.bf16.mxu0 %v350
    %383 = vmatpush1.bf16.msra.mxu0 %v349
    %384 = vmatprep.subr.bf16.mxu0 %v352
    %385 = vmatpush1.bf16.msra.mxu0 %v351
    %386 = vmatprep.subr.bf16.mxu0 %v354
    %387 = vmatpush1.bf16.msra.mxu0 %v353
    %388 = vmatprep.subr.bf16.mxu0 %v356
    %389 = vmatpush1.bf16.msra.mxu0 %v355
    %390 = vmatprep.subr.bf16.mxu0 %v358
    %391 = vmatpush1.bf16.msra.mxu0 %v357
    %392 = vmatprep.subr.bf16.mxu0 %v360
    %393 = vmatpush1.bf16.msra.mxu0 %v359
    %394 = vmatprep.subr.bf16.mxu0 %v362
    %395 = vmatpush1.bf16.msra.mxu0 %v361
    %396 = vmatprep.subr.bf16.mxu0 %v364
    %397 = vmatpush1.bf16.msra.mxu0 %v363
    %398 = vmatprep.subr.bf16.mxu0 %v366
    %399 = vmatpush1.bf16.msra.mxu0 %v365
    %400 = vmatprep.subr.bf16.mxu0 %v368
    %401 = vmatpush1.bf16.msra.mxu0 %v367
    %402 = vmatprep.subr.bf16.mxu0 %v370
    %403 = vmatpush1.bf16.msra.mxu0 %v369
    %404 = vmatprep.mubr.bf16.mxu0 %v322
    %405 = vmatmul.mubr.bf16.gmra.mrb[0].mxu0 %v321
    %v406 = vpop.f32.mrb[0].mxu0
    %v407 = vadd.f32 0.0, %v406
    %v408 = vpop.f32.mrb[0].mxu0
    %v409 = vadd.f32 0.0, %v408
    %v410 = vpop.f32.mrb[0].mxu0
    %v411 = vpop.f32.mrb[0].mxu0
    %412 = vdwg.mxu0
    %v414 = vlaneseq
    %v415 = vshrl.u32 %v414, 7
    %v416 = vsub.s32 0, %v415
    %v417 = vrot.slane %v371, %v416
    %v418 = vlaneseq
    %v419 = vshrl.u32 %v418, 7
    %v420 = vsub.s32 2, %v419
    %v421 = vrot.slane %v371, %v420
    %v424 = vlaneseq
    %v425 = vshrl.u32 %v424, 7
    %v426 = vsub.s32 0, %v425
    %v427 = vrot.slane %v417, %v426
    %v428 = vlaneseq
    %v429 = vshrl.u32 %v428, 7
    %v430 = vsub.s32 0, %v429
    %v431 = vrot.slane %v421, %v430
    %v432 = vmul.f32 %v407, %v427
    %v433 = vmul.f32 %v409, %v431
    %v434 = vlaneseq
    %v435 = vshrl.u32 %v434, 7
    %v436 = vsub.s32 1, %v435
    %v437 = vrot.slane %v371, %v436
    %v438 = vlaneseq
    %v439 = vshrl.u32 %v438, 7
    %v440 = vsub.s32 3, %v439
    %v441 = vrot.slane %v371, %v440
    %v444 = vlaneseq
    %v445 = vshrl.u32 %v444, 7
    %v446 = vsub.s32 1, %v445
    %v447 = vrot.slane %v437, %v446
    %v448 = vlaneseq
    %v449 = vshrl.u32 %v448, 7
    %v450 = vsub.s32 1, %v449
    %v451 = vrot.slane %v441, %v450
    %v452 = vadd.f32 %v432, %v447
    %v453 = vadd.f32 %v433, %v451
    %v454 = vmax.f32 %v452, 0.0
    %v455 = vmax.f32 %v453, 0.0
    %v456 = vpack.c.bf16 %v454, %v454
    %v457 = vpack.c.bf16 %v455, %v455
    %v458 = vld [vmem:[#allocation11] sm:$0xff]
    %v459 = vld [vmem:[#allocation11 + $0x8] sm:$0xff]
    %v460 = vld [vmem:[#allocation11 + $0x10] sm:$0xff]
    %v461 = vld [vmem:[#allocation11 + $0x18] sm:$0xff]
    %v462 = vld [vmem:[#allocation11 + $0x20] sm:$0xff]
    %v463 = vld [vmem:[#allocation11 + $0x28] sm:$0xff]
    %v464 = vld [vmem:[#allocation11 + $0x30] sm:$0xff]
    %v465 = vld [vmem:[#allocation11 + $0x38] sm:$0xff]
    %v466 = vunpack.c.l.s8.bf16 %v458
    %v467 = vunpack.c.h.s8.bf16 %v458
    %v468 = vunpack.c.l.s8.bf16 %v459
    %v469 = vunpack.c.h.s8.bf16 %v459
    %v470 = vunpack.c.l.s8.bf16 %v460
    %v471 = vunpack.c.h.s8.bf16 %v460
    %v472 = vunpack.c.l.s8.bf16 %v461
    %v473 = vunpack.c.h.s8.bf16 %v461
    %v474 = vunpack.c.l.s8.bf16 %v462
    %v475 = vunpack.c.h.s8.bf16 %v462
    %v476 = vunpack.c.l.s8.bf16 %v463
    %v477 = vunpack.c.h.s8.bf16 %v463
    %v478 = vunpack.c.l.s8.bf16 %v464
    %v479 = vunpack.c.h.s8.bf16 %v464
    %v480 = vunpack.c.l.s8.bf16 %v465
    %v481 = vunpack.c.h.s8.bf16 %v465
    %v482 = vld [vmem:[%s6] sm:$0x3]
    %483 = vmatprep.subr.bf16.mxu0 0
    %484 = vmatpush1.bf16.msra.mxu0 %v466
    %485 = vmatprep.subr.bf16.mxu0 0
    %486 = vmatpush1.bf16.msra.mxu0 %v467
    %487 = vmatprep.subr.bf16.mxu0 0
    %488 = vmatpush1.bf16.msra.mxu0 %v468
    %489 = vmatprep.subr.bf16.mxu0 0
    %490 = vmatpush1.bf16.msra.mxu0 %v469
    %491 = vmatprep.subr.bf16.mxu0 0
    %492 = vmatpush1.bf16.msra.mxu0 %v470
    %493 = vmatprep.subr.bf16.mxu0 0
    %494 = vmatpush1.bf16.msra.mxu0 %v471
    %495 = vmatprep.subr.bf16.mxu0 0
    %496 = vmatpush1.bf16.msra.mxu0 %v472
    %497 = vmatprep.subr.bf16.mxu0 0
    %498 = vmatpush1.bf16.msra.mxu0 %v473
    %499 = vmatprep.subr.bf16.mxu0 0
    %500 = vmatpush1.bf16.msra.mxu0 %v474
    %501 = vmatprep.subr.bf16.mxu0 0
    %502 = vmatpush1.bf16.msra.mxu0 %v475
    %503 = vmatprep.subr.bf16.mxu0 0
    %504 = vmatpush1.bf16.msra.mxu0 %v476
    %505 = vmatprep.subr.bf16.mxu0 0
    %506 = vmatpush1.bf16.msra.mxu0 %v477
    %507 = vmatprep.subr.bf16.mxu0 0
    %508 = vmatpush1.bf16.msra.mxu0 %v478
    %509 = vmatprep.subr.bf16.mxu0 0
    %510 = vmatpush1.bf16.msra.mxu0 %v479
    %511 = vmatprep.subr.bf16.mxu0 0
    %512 = vmatpush1.bf16.msra.mxu0 %v480
    %513 = vmatprep.subr.bf16.mxu0 0
    %514 = vmatpush1.bf16.msra.mxu0 %v481
    %515 = vmatprep.mubr.bf16.mxu0 %v457
    %516 = vmatmul.mubr.bf16.gmra.mrb[0].mxu0 %v456
    %v517 = vpop.f32.mrb[0].mxu0
    %v518 = vadd.f32 0.0, %v517
    %v519 = vpop.f32.mrb[0].mxu0
    %v520 = vpop.f32.mrb[0].mxu0
    %v521 = vpop.f32.mrb[0].mxu0
    %522 = vdwg.mxu0
    %v523 = vlaneseq
    %v524 = vshrl.u32 %v523, 7
    %v525 = vsub.s32 0, %v524
    %v526 = vrot.slane %v482, %v525
    %v527 = vmul.f32 %v518, %v526
    %v528 = vlaneseq
    %v529 = vshrl.u32 %v528, 7
    %v530 = vsub.s32 1, %v529
    %v531 = vrot.slane %v482, %v530
    %v532 = vadd.f32 %v527, %v531
    %v533 = vmax.f32 %v532, 0.0
    %v534 = vpack.c.bf16 %v533, %v533
    %v535 = vld [vmem:[#allocation13] sm:$0xff]
    %v536 = vld [vmem:[#allocation13 + $0x8] sm:$0xff]
    %v537 = vld [vmem:[#allocation13 + $0x10] sm:$0xff]
    %v538 = vld [vmem:[#allocation13 + $0x18] sm:$0xff]
    %v539 = vunpack.c.l.s8.bf16 %v535
    %v540 = vunpack.c.h.s8.bf16 %v535
    %v541 = vunpack.c.l.s8.bf16 %v536
    %v542 = vunpack.c.h.s8.bf16 %v536
    %v543 = vunpack.c.l.s8.bf16 %v537
    %v544 = vunpack.c.h.s8.bf16 %v537
    %v545 = vunpack.c.l.s8.bf16 %v538
    %v546 = vunpack.c.h.s8.bf16 %v538
    %v547 = vld [vmem:[#allocation14] sm:$0x3]
    %548 = vmatprep.subr.bf16.mxu0 0
    %549 = vmatpush1.bf16.msra.mxu0 %v539
    %550 = vmatprep.subr.bf16.mxu0 0
    %551 = vmatpush1.bf16.msra.mxu0 %v540
    %552 = vmatprep.subr.bf16.mxu0 0
    %553 = vmatpush1.bf16.msra.mxu0 %v541
    %554 = vmatprep.subr.bf16.mxu0 0
    %555 = vmatpush1.bf16.msra.mxu0 %v542
    %556 = vmatprep.subr.bf16.mxu0 0
    %557 = vmatpush1.bf16.msra.mxu0 %v543
    %558 = vmatprep.subr.bf16.mxu0 0
    %559 = vmatpush1.bf16.msra.mxu0 %v544
    %560 = vmatprep.subr.bf16.mxu0 0
    %561 = vmatpush1.bf16.msra.mxu0 %v545
    %562 = vmatprep.subr.bf16.mxu0 0
    %563 = vmatpush1.bf16.msra.mxu0 %v546
    %564 = vmatprep.subr.bf16.mxu0 0
    %565 = vmatpush1.bf16.msra.mxu0 0
    %566 = vmatprep.subr.bf16.mxu0 0
    %567 = vmatpush1.bf16.msra.mxu0 0
    %568 = vmatprep.subr.bf16.mxu0 0
    %569 = vmatpush1.bf16.msra.mxu0 0
    %570 = vmatprep.subr.bf16.mxu0 0
    %571 = vmatpush1.bf16.msra.mxu0 0
    %572 = vmatprep.subr.bf16.mxu0 0
    %573 = vmatpush1.bf16.msra.mxu0 0
    %574 = vmatprep.subr.bf16.mxu0 0
    %575 = vmatpush1.bf16.msra.mxu0 0
    %576 = vmatprep.subr.bf16.mxu0 0
    %577 = vmatpush1.bf16.msra.mxu0 0
    %578 = vmatprep.subr.bf16.mxu0 0
    %579 = vmatpush1.bf16.msra.mxu0 0
    %580 = vmatprep.mubr.bf16.mxu0 0
    %581 = vmatmul.mubr.bf16.gmra.mrb[0].mxu0 %v534
    %v582 = vpop.f32.mrb[0].mxu0
    %v583 = vadd.f32 0.0, %v582
    %v584 = vpop.f32.mrb[0].mxu0
    %v585 = vpop.f32.mrb[0].mxu0
    %v586 = vpop.f32.mrb[0].mxu0
    %587 = vdwg.mxu0
    %v588 = vlaneseq
    %v589 = vshrl.u32 %v588, 7
    %v590 = vsub.s32 0, %v589
    %v591 = vrot.slane %v547, %v590
    %v592 = vmul.f32 %v583, %v591
    %v593 = vlaneseq
    %v594 = vshrl.u32 %v593, 7
    %v595 = vsub.s32 1, %v594
    %v596 = vrot.slane %v547, %v595
    %v597 = vadd.f32 %v592, %v596
    %v598 = vmax.f32 %v597, 0.0
    %v599 = vpack.c.bf16 %v598, %v598
    %v600 = vld [vmem:[%s9] sm:$0xff]
    %v601 = vld [vmem:[%s9 + $0x8] sm:$0xff]
    %v602 = vld [vmem:[%s9 + $0x10] sm:$0xff]
    %v603 = vld [vmem:[%s9 + $0x18] sm:$0xff]
    %v604 = vunpack.c.l.s8.bf16 %v600
    %v605 = vunpack.c.h.s8.bf16 %v600
    %v606 = vunpack.c.l.s8.bf16 %v601
    %v607 = vunpack.c.h.s8.bf16 %v601
    %v608 = vunpack.c.l.s8.bf16 %v602
    %v609 = vunpack.c.h.s8.bf16 %v602
    %v610 = vunpack.c.l.s8.bf16 %v603
    %v611 = vunpack.c.h.s8.bf16 %v603
    %v612 = vld [vmem:[%s10] sm:$0x3]
    %613 = vmatprep.subr.bf16.mxu0 0
    %614 = vmatpush1.bf16.msra.mxu0 %v604
    %615 = vmatprep.subr.bf16.mxu0 0
    %616 = vmatpush1.bf16.msra.mxu0 %v605
    %617 = vmatprep.subr.bf16.mxu0 0
    %618 = vmatpush1.bf16.msra.mxu0 %v606
    %619 = vmatprep.subr.bf16.mxu0 0
    %620 = vmatpush1.bf16.msra.mxu0 %v607
    %621 = vmatprep.subr.bf16.mxu0 0
    %622 = vmatpush1.bf16.msra.mxu0 %v608
    %623 = vmatprep.subr.bf16.mxu0 0
    %624 = vmatpush1.bf16.msra.mxu0 %v609
    %625 = vmatprep.subr.bf16.mxu0 0
    %626 = vmatpush1.bf16.msra.mxu0 %v610
    %627 = vmatprep.subr.bf16.mxu0 0
    %628 = vmatpush1.bf16.msra.mxu0 %v611
    %629 = vmatprep.subr.bf16.mxu0 0
    %630 = vmatpush1.bf16.msra.mxu0 0
    %631 = vmatprep.subr.bf16.mxu0 0
    %632 = vmatpush1.bf16.msra.mxu0 0
    %633 = vmatprep.subr.bf16.mxu0 0
    %634 = vmatpush1.bf16.msra.mxu0 0
    %635 = vmatprep.subr.bf16.mxu0 0
    %636 = vmatpush1.bf16.msra.mxu0 0
    %637 = vmatprep.subr.bf16.mxu0 0
    %638 = vmatpush1.bf16.msra.mxu0 0
    %639 = vmatprep.subr.bf16.mxu0 0
    %640 = vmatpush1.bf16.msra.mxu0 0
    %641 = vmatprep.subr.bf16.mxu0 0
    %642 = vmatpush1.bf16.msra.mxu0 0
    %643 = vmatprep.subr.bf16.mxu0 0
    %644 = vmatpush1.bf16.msra.mxu0 0
    %645 = vmatprep.mubr.bf16.mxu0 0
    %646 = vmatmul.mubr.bf16.gmra.mrb[0].mxu0 %v599
    %v647 = vpop.f32.mrb[0].mxu0
    %v648 = vadd.f32 0.0, %v647
    %v649 = vpop.f32.mrb[0].mxu0
    %v650 = vpop.f32.mrb[0].mxu0
    %v651 = vpop.f32.mrb[0].mxu0
    %652 = vdwg.mxu0
    %v653 = vlaneseq
    %v654 = vshrl.u32 %v653, 7
    %v655 = vsub.s32 0, %v654
    %v656 = vrot.slane %v612, %v655
    %v657 = vmul.f32 %v648, %v656
    %v658 = vlaneseq
    %v659 = vshrl.u32 %v658, 7
    %v660 = vsub.s32 1, %v659
    %v661 = vrot.slane %v612, %v660
    %v662 = vadd.f32 %v657, %v661
    %v663 = vmax.f32 %v662, 0.0
    %v664 = vpack.c.bf16 %v663, %v663
    %v665 = vld [vmem:[#allocation16] sm:$0xff]
    %v666 = vld [vmem:[#allocation16 + $0x8] sm:$0xff]
    %v667 = vld [vmem:[#allocation16 + $0x10] sm:$0xff]
    %v668 = vld [vmem:[#allocation16 + $0x18] sm:$0xff]
    %v669 = vunpack.c.l.s8.bf16 %v665
    %v670 = vunpack.c.h.s8.bf16 %v665
    %v671 = vunpack.c.l.s8.bf16 %v666
    %v672 = vunpack.c.h.s8.bf16 %v666
    %v673 = vunpack.c.l.s8.bf16 %v667
    %v674 = vunpack.c.h.s8.bf16 %v667
    %v675 = vunpack.c.l.s8.bf16 %v668
    %v676 = vunpack.c.h.s8.bf16 %v668
    %v677 = vld [vmem:[%s12] sm:$0x3]
    %678 = vmatprep.subr.bf16.mxu0 0
    %679 = vmatpush1.bf16.msra.mxu0 %v669
    %680 = vmatprep.subr.bf16.mxu0 0
    %681 = vmatpush1.bf16.msra.mxu0 %v670
    %682 = vmatprep.subr.bf16.mxu0 0
    %683 = vmatpush1.bf16.msra.mxu0 %v671
    %684 = vmatprep.subr.bf16.mxu0 0
    %685 = vmatpush1.bf16.msra.mxu0 %v672
    %686 = vmatprep.subr.bf16.mxu0 0
    %687 = vmatpush1.bf16.msra.mxu0 %v673
    %688 = vmatprep.subr.bf16.mxu0 0
    %689 = vmatpush1.bf16.msra.mxu0 %v674
    %690 = vmatprep.subr.bf16.mxu0 0
    %691 = vmatpush1.bf16.msra.mxu0 %v675
    %692 = vmatprep.subr.bf16.mxu0 0
    %693 = vmatpush1.bf16.msra.mxu0 %v676
    %694 = vmatprep.subr.bf16.mxu0 0
    %695 = vmatpush1.bf16.msra.mxu0 0
    %696 = vmatprep.subr.bf16.mxu0 0
    %697 = vmatpush1.bf16.msra.mxu0 0
    %698 = vmatprep.subr.bf16.mxu0 0
    %699 = vmatpush1.bf16.msra.mxu0 0
    %700 = vmatprep.subr.bf16.mxu0 0
    %701 = vmatpush1.bf16.msra.mxu0 0
    %702 = vmatprep.subr.bf16.mxu0 0
    %703 = vmatpush1.bf16.msra.mxu0 0
    %704 = vmatprep.subr.bf16.mxu0 0
    %705 = vmatpush1.bf16.msra.mxu0 0
    %706 = vmatprep.subr.bf16.mxu0 0
    %707 = vmatpush1.bf16.msra.mxu0 0
    %708 = vmatprep.subr.bf16.mxu0 0
    %709 = vmatpush1.bf16.msra.mxu0 0
    %710 = vmatprep.mubr.bf16.mxu0 0
    %711 = vmatmul.mubr.bf16.gmra.mrb[0].mxu0 %v664
    %v712 = vpop.f32.mrb[0].mxu0
    %v713 = vadd.f32 0.0, %v712
    %v714 = vpop.f32.mrb[0].mxu0
    %v715 = vpop.f32.mrb[0].mxu0
    %v716 = vpop.f32.mrb[0].mxu0
    %717 = vdwg.mxu0
    %v718 = vlaneseq
    %v719 = vshrl.u32 %v718, 7
    %v720 = vsub.s32 0, %v719
    %v721 = vrot.slane %v677, %v720
    %v722 = vmul.f32 %v713, %v721
    %v723 = vlaneseq
    %v724 = vshrl.u32 %v723, 7
    %v725 = vsub.s32 1, %v724
    %v726 = vrot.slane %v677, %v725
    %v727 = vadd.f32 %v722, %v726
    %v728 = vmax.f32 %v727, 0.0
    %v729 = vpack.c.bf16 %v728, %v728
    %v730 = vld [vmem:[#allocation17] sm:$0xff]
    %v731 = vld [vmem:[#allocation17 + $0x8] sm:$0xff]
    %v732 = vld [vmem:[#allocation17 + $0x10] sm:$0xff]
    %v733 = vld [vmem:[#allocation17 + $0x18] sm:$0xff]
    %v734 = vunpack.c.l.s8.bf16 %v730
    %v735 = vunpack.c.h.s8.bf16 %v730
    %v736 = vunpack.c.l.s8.bf16 %v731
    %v737 = vunpack.c.h.s8.bf16 %v731
    %v738 = vunpack.c.l.s8.bf16 %v732
    %v739 = vunpack.c.h.s8.bf16 %v732
    %v740 = vunpack.c.l.s8.bf16 %v733
    %v741 = vunpack.c.h.s8.bf16 %v733
    %v742 = vld [vmem:[%s14] sm:$0x3]
    %743 = vmatprep.subr.bf16.mxu0 0
    %744 = vmatpush1.bf16.msra.mxu0 %v734
    %745 = vmatprep.subr.bf16.mxu0 0
    %746 = vmatpush1.bf16.msra.mxu0 %v735
    %747 = vmatprep.subr.bf16.mxu0 0
    %748 = vmatpush1.bf16.msra.mxu0 %v736
    %749 = vmatprep.subr.bf16.mxu0 0
    %750 = vmatpush1.bf16.msra.mxu0 %v737
    %751 = vmatprep.subr.bf16.mxu0 0
    %752 = vmatpush1.bf16.msra.mxu0 %v738
    %753 = vmatprep.subr.bf16.mxu0 0
    %754 = vmatpush1.bf16.msra.mxu0 %v739
    %755 = vmatprep.subr.bf16.mxu0 0
    %756 = vmatpush1.bf16.msra.mxu0 %v740
    %757 = vmatprep.subr.bf16.mxu0 0
    %758 = vmatpush1.bf16.msra.mxu0 %v741
    %759 = vmatprep.subr.bf16.mxu0 0
    %760 = vmatpush1.bf16.msra.mxu0 0
    %761 = vmatprep.subr.bf16.mxu0 0
    %762 = vmatpush1.bf16.msra.mxu0 0
    %763 = vmatprep.subr.bf16.mxu0 0
    %764 = vmatpush1.bf16.msra.mxu0 0
    %765 = vmatprep.subr.bf16.mxu0 0
    %766 = vmatpush1.bf16.msra.mxu0 0
    %767 = vmatprep.subr.bf16.mxu0 0
    %768 = vmatpush1.bf16.msra.mxu0 0
    %769 = vmatprep.subr.bf16.mxu0 0
    %770 = vmatpush1.bf16.msra.mxu0 0
    %771 = vmatprep.subr.bf16.mxu0 0
    %772 = vmatpush1.bf16.msra.mxu0 0
    %773 = vmatprep.subr.bf16.mxu0 0
    %774 = vmatpush1.bf16.msra.mxu0 0
    %775 = vmatprep.mubr.bf16.mxu0 0
    %776 = vmatmul.mubr.bf16.gmra.mrb[0].mxu0 %v729
    %v777 = vpop.f32.mrb[0].mxu0
    %v778 = vadd.f32 0.0, %v777
    %v779 = vpop.f32.mrb[0].mxu0
    %v780 = vpop.f32.mrb[0].mxu0
    %v781 = vpop.f32.mrb[0].mxu0
    %782 = vdwg.mxu0
    %v783 = vlaneseq
    %v784 = vshrl.u32 %v783, 7
    %v785 = vsub.s32 0, %v784
    %v786 = vrot.slane %v742, %v785
    %v787 = vmul.f32 %v778, %v786
    %v788 = vlaneseq
    %v789 = vshrl.u32 %v788, 7
    %v790 = vsub.s32 1, %v789
    %v791 = vrot.slane %v742, %v790
    %v792 = vadd.f32 %v787, %v791
    %v793 = vpack.c.bf16 %v792, %v792
    %794 = vst [vmem:[#allocation19] sm:$0xf] %v793
    // Predicated region
    $region102: #{tpu_custom_call.1} parent=1 // pred_check
      _
    $region103: #{tpu_custom_call.1} parent=1 // pred_check_branch
      %796 = sbr.rel (0) target = $region105
    $region104: #{tpu_custom_call.1} parent=1 // pred_region
      %s798 = ssub.s32 64, 64
      %799 = vsyncadd [#allocation4], %s798
      %s801 = sshll.u32 [#allocation19], 4
      %s802 = int_to_ptr.vmem [resolvable:$true] %s801
      %804 = dma.vmem_to_hbm [thread:$0]  %s802, 64, %s15, [#allocation4]
    $region105: #{tpu_custom_call.1} parent=1 // pred_fallthru
      _
    // Predicated region
    $region106: #{tpu_custom_call.1} parent=1 // pred_check
      _
    $region107: #{tpu_custom_call.1} parent=1 // pred_check_branch
      %806 = sbr.rel (0) target = $region109
    $region108: #{tpu_custom_call.1} parent=1 // pred_region
      %807 = dma.done [#allocation4], 64
    $region109: #{tpu_custom_call.1} parent=1 // pred_fallthru
      _
    %808 = vsyncpa [#allocation3], 1
    %809 = vsyncpa [#allocation6], 1
    %810 = vsyncpa [#allocation9], 1
    %811 = vsyncpa [#allocation12], 1
    %812 = vsyncpa [#allocation15], 1
    %813 = vsyncpa [#allocation18], 1
    %814 = vsyncpa [#allocation4], 1

</llo_original>
